<compile_context>
chip_gen: v7x
topology: tpu7x:2x2x1
jax: 0.10.0
libtpu: 0.0.40
codegen_flags: <defaults>
</compile_context>

<pallas_src>
import jax
import jax.numpy as jnp
from jax.experimental import pallas as pl
from jax.experimental.pallas import tpu as pltpu

N_HIDDEN = 9   # number of hidden Linear(20, 20) layers
H = 20         # hidden width


def mlp_kernel(x_ref, w_in_ref, b_in_ref, w_hid_ref, b_hid_ref,
               w_out_ref, b_out_ref, o_ref):
    # x_ref: (1, tile_n)  -- batch on lanes (fully dense), features on sublanes.
    x = x_ref[...]                                            # (1, tile_n)

    # Input layer, K=1: outer product on the VPU (no MXU pass).
    #   (H, 1) * (1, tile_n) + (H, 1)  ->  (H, tile_n)
    h = jnp.tanh(w_in_ref[...] * x + b_in_ref[...])

    # Hidden layers: W_i @ h on the MXU; N=tile_n is the lane-dense dim.
    # Fully unrolled (9 iters, tiny weights) so the LLO scheduler can overlap
    # MXU pushes with the EUP tanh of the previous layer.
    for i in range(N_HIDDEN):
        h = jnp.tanh(
            jnp.dot(w_hid_ref[i], h, preferred_element_type=jnp.float32)
            + b_hid_ref[i]
        )

    # Output layer, M=1: lane-dense VPU multiply + sublane (XLU) reduction.
    o_ref[...] = (
        jnp.sum(w_out_ref[...] * h, axis=0, keepdims=True)    # (1, tile_n)
        + b_out_ref[0]                                        # scalar from SMEM
    )


def function_approximator(x, params, *, tile_n=512):
    """x: (N, 1) float32; params from init_params(). Returns (N, 1) float32."""
    w_in, b_in, w_hid, b_hid, w_out, b_out = params
    N = x.shape[0]

    # Lane-dense tile size: multiple of 128, no larger than needed to cover N.
    tile_n = max(128, (tile_n // 128) * 128)
    tile_n = min(tile_n, max(128, ((N + 127) // 128) * 128))

    n_tiles = pl.cdiv(N, tile_n)
    n_pad = n_tiles * tile_n

    # Batch onto lanes: (N, 1) -> (1, N) (contiguous, no data movement),
    # pad lanes up to a tile multiple.
    xt = x.reshape(1, N)
    if n_pad != N:
        xt = jnp.pad(xt, ((0, 0), (0, n_pad - N)))

    def const_spec(*shape):
        # Constant operand: same block every grid step -> DMA'd once, stays in VMEM.
        return pl.BlockSpec(shape, lambda i, _nd=len(shape): (0,) * _nd)

    out = pl.pallas_call(
        mlp_kernel,
        out_shape=jax.ShapeDtypeStruct((1, n_pad), jnp.float32),
        grid_spec=pltpu.PrefetchScalarGridSpec(
            num_scalar_prefetch=0,
            grid=(n_tiles,),
            in_specs=[
                pl.BlockSpec((1, tile_n), lambda i: (0, i)),        # x tile
                const_spec(H, 1),                                   # w_in  (20, 1)
                const_spec(H, 1),                                   # b_in  (20, 1)
                const_spec(N_HIDDEN, H, H),                         # w_hid (9, 20, 20)
                const_spec(N_HIDDEN, H, 1),                         # b_hid (9, 20, 1)
                const_spec(H, 1),                                   # w_out (20, 1)
                pl.BlockSpec(memory_space=pltpu.MemorySpace.SMEM),  # b_out scalar
            ],
            out_specs=pl.BlockSpec((1, tile_n), lambda i: (0, i)),
        ),
        compiler_params=pltpu.CompilerParams(
            dimension_semantics=("parallel",)),
    )(xt, w_in, b_in, w_hid, b_hid, w_out, b_out)

    return out[:, :N].reshape(N, 1)


def init_params(key):
    """Deterministic init mimicking PyTorch Linear default U(-1/sqrt(fan_in), 1/sqrt(fan_in)).
    Weights are stored in PyTorch (out_features, in_features) orientation."""
    ks = jax.random.split(key, 6)

    def unif(k, shape, fan_in):
        bound = 1.0 / jnp.sqrt(jnp.float32(fan_in))
        return jax.random.uniform(k, shape, jnp.float32, -bound, bound)

    w_in = unif(ks[0], (H, 1), 1)                 # Linear(1, 20).weight
    b_in = unif(ks[1], (H, 1), 1)                 # Linear(1, 20).bias (column)
    w_hid = unif(ks[2], (N_HIDDEN, H, H), H)      # 9 x Linear(20, 20).weight
    b_hid = unif(ks[3], (N_HIDDEN, H, 1), H)      # 9 x Linear(20, 20).bias (column)
    w_out = unif(ks[4], (H, 1), H)                # Linear(20, 1).weight.T
    b_out = unif(ks[5], (1,), H)                  # Linear(20, 1).bias (scalar)
    return w_in, b_in, w_hid, b_hid, w_out, b_out


def reference_forward(x, params):
    """Pure-JAX reference in the standard (batch, features) layout."""
    w_in, b_in, w_hid, b_hid, w_out, b_out = params
    h = jnp.tanh(x @ w_in.T + b_in.T)             # (N, 20)
    for i in range(N_HIDDEN):
        h = jnp.tanh(h @ w_hid[i].T + b_hid[i].T)
    return h @ w_out + b_out                      # (N, 1)


if __name__ == "__main__":
    key = jax.random.PRNGKey(0)
    k_params, k_x = jax.random.split(key)
    params = init_params(k_params)

    # 1-D collocation points. 1024 points with tile_n=512 -> grid of 2 parallel
    # steps (keeps both v7x TensorCores busy and exercises the pipeline).
    N = 1024
    x = jax.random.uniform(k_x, (N, 1), jnp.float32, -1.0, 1.0)

    out = jax.block_until_ready(function_approximator(x, params, tile_n=512))
    ref = reference_forward(x, params)

    assert out.shape == (N, 1)
    assert jnp.allclose(out, ref, atol=1e-4, rtol=1e-4), "mismatch vs pure-JAX reference"

    # Also exercise a ragged, smaller-than-tile batch to check the adaptive
    # tile / padding path.
    N2 = 200
    x2 = jax.random.uniform(jax.random.PRNGKey(1), (N2, 1), jnp.float32, -1.0, 1.0)
    out2 = jax.block_until_ready(function_approximator(x2, params, tile_n=512))
    ref2 = reference_forward(x2, params)
    assert out2.shape == (N2, 1)
    assert jnp.allclose(out2, ref2, atol=1e-4, rtol=1e-4), "mismatch (ragged batch)"

    print("KERNEL_OK")
</pallas_src>

<mosaic_0001>
module attributes {stable_mosaic.version = 11 : i64} {
  func.func @mlp_kernel(%arg0: i32, %arg1: memref<1x512xf32, #tpu.memory_space<vmem>>, %arg2: memref<20x1xf32, #tpu.memory_space<vmem>>, %arg3: memref<20x1xf32, #tpu.memory_space<vmem>>, %arg4: memref<9x20x20xf32, #tpu.memory_space<vmem>>, %arg5: memref<9x20x1xf32, #tpu.memory_space<vmem>>, %arg6: memref<20x1xf32, #tpu.memory_space<vmem>>, %arg7: memref<1xf32, #tpu.memory_space<smem>>, %arg8: memref<1x512xf32, #tpu.memory_space<vmem>>) attributes {dimension_semantics = [#tpu.dimension_semantics<parallel>], iteration_bounds = array<i64: 2>, scalar_prefetch = 0 : i64, scratch_operands = 0 : i64, tpu.core_type = #tpu.core_type<tc>, window_params = [{transform_indices = @transform_0, window_bounds = array<i64: 1, 512>}, {pipeline_mode = #tpu.pipeline_mode<synchronous>, transform_indices = @transform_1, window_bounds = array<i64: 20, 1>}, {pipeline_mode = #tpu.pipeline_mode<synchronous>, transform_indices = @transform_2, window_bounds = array<i64: 20, 1>}, {pipeline_mode = #tpu.pipeline_mode<synchronous>, transform_indices = @transform_3, window_bounds = array<i64: 9, 20, 20>}, {pipeline_mode = #tpu.pipeline_mode<synchronous>, transform_indices = @transform_4, window_bounds = array<i64: 9, 20, 1>}, {pipeline_mode = #tpu.pipeline_mode<synchronous>, transform_indices = @transform_5, window_bounds = array<i64: 20, 1>}, {transform_indices = @transform_6, window_bounds = array<i64: 1>}, {transform_indices = @transform_7, window_bounds = array<i64: 1, 512>}]} {
    %c0 = arith.constant 0 : index
    %c0_0 = arith.constant 0 : index
    %0 = vector.load %arg1[%c0, %c0_0] : memref<1x512xf32, #tpu.memory_space<vmem>>, vector<1x512xf32>
    %c0_1 = arith.constant 0 : index
    %c0_2 = arith.constant 0 : index
    %1 = vector.load %arg2[%c0_1, %c0_2] : memref<20x1xf32, #tpu.memory_space<vmem>>, vector<20x1xf32>
    %2 = vector.broadcast %1 : vector<20x1xf32> to vector<20x512xf32>
    %3 = vector.broadcast %0 : vector<1x512xf32> to vector<20x512xf32>
    %4 = arith.mulf %2, %3 : vector<20x512xf32>
    %c0_3 = arith.constant 0 : index
    %c0_4 = arith.constant 0 : index
    %5 = vector.load %arg3[%c0_3, %c0_4] : memref<20x1xf32, #tpu.memory_space<vmem>>, vector<20x1xf32>
    %6 = vector.broadcast %5 : vector<20x1xf32> to vector<20x512xf32>
    %7 = arith.addf %4, %6 : vector<20x512xf32>
    %8 = math.tanh %7 : vector<20x512xf32>
    %c0_5 = arith.constant 0 : index
    %c0_6 = arith.constant 0 : index
    %c0_7 = arith.constant 0 : index
    %9 = vector.load %arg4[%c0_5, %c0_6, %c0_7] : memref<9x20x20xf32, #tpu.memory_space<vmem>>, vector<1x20x20xf32>
    %10 = vector.shape_cast %9 : vector<1x20x20xf32> to vector<20x20xf32>
    %cst = arith.constant dense<0.000000e+00> : vector<20x512xf32>
    %11 = tpu.matmul %10, %8, %cst {dimension_numbers = #tpu.dot_dimension_numbers<[1], [0], [0], [1], [0, 0, 1, 1], [], []>} : vector<20x20xf32>, vector<20x512xf32>, vector<20x512xf32> -> vector<20x512xf32>
    %c0_8 = arith.constant 0 : index
    %c0_9 = arith.constant 0 : index
    %c0_10 = arith.constant 0 : index
    %12 = vector.load %arg5[%c0_8, %c0_9, %c0_10] : memref<9x20x1xf32, #tpu.memory_space<vmem>>, vector<1x20x1xf32>
    %13 = vector.shape_cast %12 : vector<1x20x1xf32> to vector<20x1xf32>
    %14 = vector.broadcast %13 : vector<20x1xf32> to vector<20x512xf32>
    %15 = arith.addf %11, %14 : vector<20x512xf32>
    %16 = math.tanh %15 : vector<20x512xf32>
    %c1 = arith.constant 1 : index
    %c0_11 = arith.constant 0 : index
    %c0_12 = arith.constant 0 : index
    %17 = vector.load %arg4[%c1, %c0_11, %c0_12] : memref<9x20x20xf32, #tpu.memory_space<vmem>>, vector<1x20x20xf32>
    %18 = vector.shape_cast %17 : vector<1x20x20xf32> to vector<20x20xf32>
    %cst_13 = arith.constant dense<0.000000e+00> : vector<20x512xf32>
    %19 = tpu.matmul %18, %16, %cst_13 {dimension_numbers = #tpu.dot_dimension_numbers<[1], [0], [0], [1], [0, 0, 1, 1], [], []>} : vector<20x20xf32>, vector<20x512xf32>, vector<20x512xf32> -> vector<20x512xf32>
    %c1_14 = arith.constant 1 : index
    %c0_15 = arith.constant 0 : index
    %c0_16 = arith.constant 0 : index
    %20 = vector.load %arg5[%c1_14, %c0_15, %c0_16] : memref<9x20x1xf32, #tpu.memory_space<vmem>>, vector<1x20x1xf32>
    %21 = vector.shape_cast %20 : vector<1x20x1xf32> to vector<20x1xf32>
    %22 = vector.broadcast %21 : vector<20x1xf32> to vector<20x512xf32>
    %23 = arith.addf %19, %22 : vector<20x512xf32>
    %24 = math.tanh %23 : vector<20x512xf32>
    %c2 = arith.constant 2 : index
    %c0_17 = arith.constant 0 : index
    %c0_18 = arith.constant 0 : index
    %25 = vector.load %arg4[%c2, %c0_17, %c0_18] : memref<9x20x20xf32, #tpu.memory_space<vmem>>, vector<1x20x20xf32>
    %26 = vector.shape_cast %25 : vector<1x20x20xf32> to vector<20x20xf32>
    %cst_19 = arith.constant dense<0.000000e+00> : vector<20x512xf32>
    %27 = tpu.matmul %26, %24, %cst_19 {dimension_numbers = #tpu.dot_dimension_numbers<[1], [0], [0], [1], [0, 0, 1, 1], [], []>} : vector<20x20xf32>, vector<20x512xf32>, vector<20x512xf32> -> vector<20x512xf32>
    %c2_20 = arith.constant 2 : index
    %c0_21 = arith.constant 0 : index
    %c0_22 = arith.constant 0 : index
    %28 = vector.load %arg5[%c2_20, %c0_21, %c0_22] : memref<9x20x1xf32, #tpu.memory_space<vmem>>, vector<1x20x1xf32>
    %29 = vector.shape_cast %28 : vector<1x20x1xf32> to vector<20x1xf32>
    %30 = vector.broadcast %29 : vector<20x1xf32> to vector<20x512xf32>
    %31 = arith.addf %27, %30 : vector<20x512xf32>
    %32 = math.tanh %31 : vector<20x512xf32>
    %c3 = arith.constant 3 : index
    %c0_23 = arith.constant 0 : index
    %c0_24 = arith.constant 0 : index
    %33 = vector.load %arg4[%c3, %c0_23, %c0_24] : memref<9x20x20xf32, #tpu.memory_space<vmem>>, vector<1x20x20xf32>
    %34 = vector.shape_cast %33 : vector<1x20x20xf32> to vector<20x20xf32>
    %cst_25 = arith.constant dense<0.000000e+00> : vector<20x512xf32>
    %35 = tpu.matmul %34, %32, %cst_25 {dimension_numbers = #tpu.dot_dimension_numbers<[1], [0], [0], [1], [0, 0, 1, 1], [], []>} : vector<20x20xf32>, vector<20x512xf32>, vector<20x512xf32> -> vector<20x512xf32>
    %c3_26 = arith.constant 3 : index
    %c0_27 = arith.constant 0 : index
    %c0_28 = arith.constant 0 : index
    %36 = vector.load %arg5[%c3_26, %c0_27, %c0_28] : memref<9x20x1xf32, #tpu.memory_space<vmem>>, vector<1x20x1xf32>
    %37 = vector.shape_cast %36 : vector<1x20x1xf32> to vector<20x1xf32>
    %38 = vector.broadcast %37 : vector<20x1xf32> to vector<20x512xf32>
    %39 = arith.addf %35, %38 : vector<20x512xf32>
    %40 = math.tanh %39 : vector<20x512xf32>
    %c4 = arith.constant 4 : index
    %c0_29 = arith.constant 0 : index
    %c0_30 = arith.constant 0 : index
    %41 = vector.load %arg4[%c4, %c0_29, %c0_30] : memref<9x20x20xf32, #tpu.memory_space<vmem>>, vector<1x20x20xf32>
    %42 = vector.shape_cast %41 : vector<1x20x20xf32> to vector<20x20xf32>
    %cst_31 = arith.constant dense<0.000000e+00> : vector<20x512xf32>
    %43 = tpu.matmul %42, %40, %cst_31 {dimension_numbers = #tpu.dot_dimension_numbers<[1], [0], [0], [1], [0, 0, 1, 1], [], []>} : vector<20x20xf32>, vector<20x512xf32>, vector<20x512xf32> -> vector<20x512xf32>
    %c4_32 = arith.constant 4 : index
    %c0_33 = arith.constant 0 : index
    %c0_34 = arith.constant 0 : index
    %44 = vector.load %arg5[%c4_32, %c0_33, %c0_34] : memref<9x20x1xf32, #tpu.memory_space<vmem>>, vector<1x20x1xf32>
    %45 = vector.shape_cast %44 : vector<1x20x1xf32> to vector<20x1xf32>
    %46 = vector.broadcast %45 : vector<20x1xf32> to vector<20x512xf32>
    %47 = arith.addf %43, %46 : vector<20x512xf32>
    %48 = math.tanh %47 : vector<20x512xf32>
    %c5 = arith.constant 5 : index
    %c0_35 = arith.constant 0 : index
    %c0_36 = arith.constant 0 : index
    %49 = vector.load %arg4[%c5, %c0_35, %c0_36] : memref<9x20x20xf32, #tpu.memory_space<vmem>>, vector<1x20x20xf32>
    %50 = vector.shape_cast %49 : vector<1x20x20xf32> to vector<20x20xf32>
    %cst_37 = arith.constant dense<0.000000e+00> : vector<20x512xf32>
    %51 = tpu.matmul %50, %48, %cst_37 {dimension_numbers = #tpu.dot_dimension_numbers<[1], [0], [0], [1], [0, 0, 1, 1], [], []>} : vector<20x20xf32>, vector<20x512xf32>, vector<20x512xf32> -> vector<20x512xf32>
    %c5_38 = arith.constant 5 : index
    %c0_39 = arith.constant 0 : index
    %c0_40 = arith.constant 0 : index
    %52 = vector.load %arg5[%c5_38, %c0_39, %c0_40] : memref<9x20x1xf32, #tpu.memory_space<vmem>>, vector<1x20x1xf32>
    %53 = vector.shape_cast %52 : vector<1x20x1xf32> to vector<20x1xf32>
    %54 = vector.broadcast %53 : vector<20x1xf32> to vector<20x512xf32>
    %55 = arith.addf %51, %54 : vector<20x512xf32>
    %56 = math.tanh %55 : vector<20x512xf32>
    %c6 = arith.constant 6 : index
    %c0_41 = arith.constant 0 : index
    %c0_42 = arith.constant 0 : index
    %57 = vector.load %arg4[%c6, %c0_41, %c0_42] : memref<9x20x20xf32, #tpu.memory_space<vmem>>, vector<1x20x20xf32>
    %58 = vector.shape_cast %57 : vector<1x20x20xf32> to vector<20x20xf32>
    %cst_43 = arith.constant dense<0.000000e+00> : vector<20x512xf32>
    %59 = tpu.matmul %58, %56, %cst_43 {dimension_numbers = #tpu.dot_dimension_numbers<[1], [0], [0], [1], [0, 0, 1, 1], [], []>} : vector<20x20xf32>, vector<20x512xf32>, vector<20x512xf32> -> vector<20x512xf32>
    %c6_44 = arith.constant 6 : index
    %c0_45 = arith.constant 0 : index
    %c0_46 = arith.constant 0 : index
    %60 = vector.load %arg5[%c6_44, %c0_45, %c0_46] : memref<9x20x1xf32, #tpu.memory_space<vmem>>, vector<1x20x1xf32>
    %61 = vector.shape_cast %60 : vector<1x20x1xf32> to vector<20x1xf32>
    %62 = vector.broadcast %61 : vector<20x1xf32> to vector<20x512xf32>
    %63 = arith.addf %59, %62 : vector<20x512xf32>
    %64 = math.tanh %63 : vector<20x512xf32>
    %c7 = arith.constant 7 : index
    %c0_47 = arith.constant 0 : index
    %c0_48 = arith.constant 0 : index
    %65 = vector.load %arg4[%c7, %c0_47, %c0_48] : memref<9x20x20xf32, #tpu.memory_space<vmem>>, vector<1x20x20xf32>
    %66 = vector.shape_cast %65 : vector<1x20x20xf32> to vector<20x20xf32>
    %cst_49 = arith.constant dense<0.000000e+00> : vector<20x512xf32>
    %67 = tpu.matmul %66, %64, %cst_49 {dimension_numbers = #tpu.dot_dimension_numbers<[1], [0], [0], [1], [0, 0, 1, 1], [], []>} : vector<20x20xf32>, vector<20x512xf32>, vector<20x512xf32> -> vector<20x512xf32>
    %c7_50 = arith.constant 7 : index
    %c0_51 = arith.constant 0 : index
    %c0_52 = arith.constant 0 : index
    %68 = vector.load %arg5[%c7_50, %c0_51, %c0_52] : memref<9x20x1xf32, #tpu.memory_space<vmem>>, vector<1x20x1xf32>
    %69 = vector.shape_cast %68 : vector<1x20x1xf32> to vector<20x1xf32>
    %70 = vector.broadcast %69 : vector<20x1xf32> to vector<20x512xf32>
    %71 = arith.addf %67, %70 : vector<20x512xf32>
    %72 = math.tanh %71 : vector<20x512xf32>
    %c8 = arith.constant 8 : index
    %c0_53 = arith.constant 0 : index
    %c0_54 = arith.constant 0 : index
    %73 = vector.load %arg4[%c8, %c0_53, %c0_54] : memref<9x20x20xf32, #tpu.memory_space<vmem>>, vector<1x20x20xf32>
    %74 = vector.shape_cast %73 : vector<1x20x20xf32> to vector<20x20xf32>
    %cst_55 = arith.constant dense<0.000000e+00> : vector<20x512xf32>
    %75 = tpu.matmul %74, %72, %cst_55 {dimension_numbers = #tpu.dot_dimension_numbers<[1], [0], [0], [1], [0, 0, 1, 1], [], []>} : vector<20x20xf32>, vector<20x512xf32>, vector<20x512xf32> -> vector<20x512xf32>
    %c8_56 = arith.constant 8 : index
    %c0_57 = arith.constant 0 : index
    %c0_58 = arith.constant 0 : index
    %76 = vector.load %arg5[%c8_56, %c0_57, %c0_58] : memref<9x20x1xf32, #tpu.memory_space<vmem>>, vector<1x20x1xf32>
    %77 = vector.shape_cast %76 : vector<1x20x1xf32> to vector<20x1xf32>
    %78 = vector.broadcast %77 : vector<20x1xf32> to vector<20x512xf32>
    %79 = arith.addf %75, %78 : vector<20x512xf32>
    %80 = math.tanh %79 : vector<20x512xf32>
    %c0_59 = arith.constant 0 : index
    %c0_60 = arith.constant 0 : index
    %81 = vector.load %arg6[%c0_59, %c0_60] : memref<20x1xf32, #tpu.memory_space<vmem>>, vector<20x1xf32>
    %82 = vector.broadcast %81 : vector<20x1xf32> to vector<20x512xf32>
    %83 = arith.mulf %82, %80 : vector<20x512xf32>
    %cst_61 = arith.constant dense<0.000000e+00> : vector<512xf32>
    %84 = vector.multi_reduction <add>, %83, %cst_61 [0] : vector<20x512xf32> to vector<512xf32>
    %85 = vector.shape_cast %84 : vector<512xf32> to vector<1x512xf32>
    %c0_62 = arith.constant 0 : index
    %86 = memref.load %arg7[%c0_62] : memref<1xf32, #tpu.memory_space<smem>>
    %87 = vector.broadcast %86 : f32 to vector<1x512xf32>
    %88 = arith.addf %85, %87 : vector<1x512xf32>
    %c0_63 = arith.constant 0 : index
    %c0_64 = arith.constant 0 : index
    %89 = vector.load %arg8[%c0_63, %c0_64] : memref<1x512xf32, #tpu.memory_space<vmem>>, vector<1x512xf32>
    tpu.vector_store %arg8[%c0_63, %c0_64], %88 {strides = array<i32>} : memref<1x512xf32, #tpu.memory_space<vmem>>, vector<1x512xf32>,
    return
  }
  func.func @transform_0(%arg0: i32) -> (i32, i32) {
    %c0_i32 = arith.constant 0 : i32
    %c0_i32_0 = arith.constant 0 : i32
    return %c0_i32, %arg0 : i32, i32
  }
  func.func @transform_1(%arg0: i32) -> (i32, i32) {
    %c0_i32 = arith.constant 0 : i32
    %c0_i32_0 = arith.constant 0 : i32
    %c0_i32_1 = arith.constant 0 : i32
    return %c0_i32, %c0_i32_0 : i32, i32
  }
  func.func @transform_2(%arg0: i32) -> (i32, i32) {
    %c0_i32 = arith.constant 0 : i32
    %c0_i32_0 = arith.constant 0 : i32
    %c0_i32_1 = arith.constant 0 : i32
    return %c0_i32, %c0_i32_0 : i32, i32
  }
  func.func @transform_3(%arg0: i32) -> (i32, i32, i32) {
    %c0_i32 = arith.constant 0 : i32
    %c0_i32_0 = arith.constant 0 : i32
    %c0_i32_1 = arith.constant 0 : i32
    %c0_i32_2 = arith.constant 0 : i32
    return %c0_i32, %c0_i32_0, %c0_i32_1 : i32, i32, i32
  }
  func.func @transform_4(%arg0: i32) -> (i32, i32, i32) {
    %c0_i32 = arith.constant 0 : i32
    %c0_i32_0 = arith.constant 0 : i32
    %c0_i32_1 = arith.constant 0 : i32
    %c0_i32_2 = arith.constant 0 : i32
    return %c0_i32, %c0_i32_0, %c0_i32_1 : i32, i32, i32
  }
  func.func @transform_5(%arg0: i32) -> (i32, i32) {
    %c0_i32 = arith.constant 0 : i32
    %c0_i32_0 = arith.constant 0 : i32
    %c0_i32_1 = arith.constant 0 : i32
    return %c0_i32, %c0_i32_0 : i32, i32
  }
  func.func @transform_6(%arg0: i32) -> i32 {
    %c0_i32 = arith.constant 0 : i32
    %c0_i32_0 = arith.constant 0 : i32
    return %c0_i32 : i32
  }
  func.func @transform_7(%arg0: i32) -> (i32, i32) {
    %c0_i32 = arith.constant 0 : i32
    %c0_i32_0 = arith.constant 0 : i32
    return %c0_i32, %arg0 : i32, i32
  }
}

</mosaic_0001>

<llo_original>
// kernel: tpu_custom_call.1
$region0: #{tpu_custom_call.1}
  #allocation0 [shape = 'u32[]', space=smem, size = 0x4, offset = 0x4, fixed_abs, tag = 'smem constant byte address 0x4 - core index']
  #allocation1 [shape = 'u32[144,128]{1,0:T(1,128)}', space=vmem, size = 0x12000, scoped, tag = 'internal scratch']
  #allocation2 [shape = 'f32[1]{0:T(128)S(6)}', space=smem, size = 0x200, scoped, tag = 'scoped memory for tpu_custom_call.1']
  %s0 = inlined_call_operand.vmem [shape: f32[1,1024], index: 0, kind: input, shape index: {}]
  %s1 = inlined_call_operand.vmem [shape: f32[20,1], index: 1, kind: input, shape index: {}]
  %s2 = inlined_call_operand.vmem [shape: f32[20,1], index: 2, kind: input, shape index: {}]
  %s3 = inlined_call_operand.vmem [shape: f32[9,20,20], index: 3, kind: input, shape index: {}]
  %s4 = inlined_call_operand.vmem [shape: f32[9,20,1], index: 4, kind: input, shape index: {}]
  %s5 = inlined_call_operand.vmem [shape: f32[20,1], index: 5, kind: input, shape index: {}]
  %s6 = inlined_call_operand.<no memory space> [shape: f32[1], index: 6, kind: input, shape index: {}]
  %s7 = inlined_call_operand.hbm [shape: f32[1,1024], index: 7, kind: output, shape index: {}]
  %s8 = sld [smem:[#allocation0]]
  $region61: #{tpu_custom_call.1} parent=0
    _
  %s10 = ssub.s32 1, %s8
  %s11 = scalar_select 0, %s10, %s8
  %12 = sst [smem:[#allocation2]] %s6
  $region1: #{tpu_custom_call.1} parent=0
    #allocation3 [shape = 'u8[4096]{0}', space=vmem, size = 0x1000, scoped, tag = 'output window, operand 0']
    #allocation4 [shape = 's32[2]{0}', space=sflag, size = 0x8, scoped, tag = 'scoped memory for tpu_custom_call.1']
    %13 = vsyncpa [#allocation4], 0
    %s14 = scalar_lea.sflag [#allocation4], 1
    %15 = vsyncpa %s14, 0
    loop: start=0, step=1, limit=4
    $region2: #{tpu_custom_call.1} parent=1 // loop_pre_header
      _
    $region3: #{tpu_custom_call.1} parent=1 // loop_header
      %s17 = sphi 0, %s21
      %p18 = scmp.ge.s32.totalorder %s17, 4
      %s27 = sphi 0, %s29
      %s30 = sphi 0, %s27
      %s31 = sphi 0, %s30
      %s47 = sphi 0, %s31
      %s51 = sphi 0, %s51
      %s53 = sphi 0, %s51
      %s54 = sphi 0, %s53
      %s68 = sphi 0, %s54
      %s72 = sphi 0, %s72
      %s74 = sphi 0, %s72
      %s75 = sphi 0, %s74
      %s89 = sphi 0, %s75
      %s93 = sphi 0, %s93
      %s95 = sphi 0, %s93
      %s96 = sphi 0, %s95
      %s110 = sphi 0, %s96
      %s114 = sphi 0, %s114
      %s116 = sphi 0, %s114
      %s117 = sphi 0, %s116
      %s131 = sphi 0, %s117
      %s135 = sphi 0, %s135
      %s137 = sphi 0, %s135
      %s138 = sphi 0, %s137
      %s152 = sphi 0, %s138
      %s156 = sphi 0, %s156
      %s158 = sphi 0, %s156
      %s159 = sphi 0, %s158
      %s173 = sphi 0, %s159
      %s179 = sphi 0, %s181
      %s182 = sphi 0, %s179
      %s183 = sphi 0, %s182
      %s199 = sphi 0, %s183
    $region4: #{tpu_custom_call.1} parent=1 // loop_header_branch
      %20 = sbr.rel (%p18) target = $region8
    $region5: #{tpu_custom_call.1} parent=1 // loop_body
      %s22 = ssub.s32 %s17, 1
      %s23 = ssub.s32 %s17, 2
      %s24 = sadd.s32 %s17, 1
      %s25 = ssub.s32 %s17, %s24
      %p26 = scmp.eq.s32.totalorder %s25, 0
      %s28 = sadd.s32 %s27, 1
      %s29 = scalar_select %p26, %s27, %s28
      %p32 = pneg %p26
      %p33 = scmp.eq.s32.totalorder %s17, 1
      %p34 = por %p32, %p33
      %p35 = scmp.ne.s32.totalorder %s27, %s30
      %p36 = scmp.eq.s32.totalorder %s17, 0
      %p37 = por %p35, %p36
      %p38 = scmp.ne.s32.totalorder %s27, %s30
      %p39 = scmp.eq.s32.totalorder %s22, 1
      %p40 = por %p38, %p39
      %p41 = scmp.ne.s32.totalorder %s30, %s31
      %p42 = scmp.eq.s32.totalorder %s22, 0
      %p43 = por %p41, %p42
      %p44 = scmp.ne.s32.totalorder %s30, %s31
      %p45 = scmp.eq.s32.totalorder %s23, 1
      %p46 = por %p44, %p45
      %p48 = scmp.ne.s32.totalorder %s31, %s47
      %p49 = scmp.eq.s32.totalorder %s23, 0
      %p50 = por %p48, %p49
      %s52 = sadd.s32 %s51, 1
      %p55 = scmp.eq.s32.totalorder %s17, 1
      %p56 = scmp.ne.s32.totalorder %s51, %s53
      %p57 = scmp.eq.s32.totalorder %s17, 0
      %p58 = por %p56, %p57
      %p59 = scmp.ne.s32.totalorder %s51, %s53
      %p60 = scmp.eq.s32.totalorder %s22, 1
      %p61 = por %p59, %p60
      %p62 = scmp.ne.s32.totalorder %s53, %s54
      %p63 = scmp.eq.s32.totalorder %s22, 0
      %p64 = por %p62, %p63
      %p65 = scmp.ne.s32.totalorder %s53, %s54
      %p66 = scmp.eq.s32.totalorder %s23, 1
      %p67 = por %p65, %p66
      %p69 = scmp.ne.s32.totalorder %s54, %s68
      %p70 = scmp.eq.s32.totalorder %s23, 0
      %p71 = por %p69, %p70
      %s73 = sadd.s32 %s72, 1
      %p76 = scmp.eq.s32.totalorder %s17, 1
      %p77 = scmp.ne.s32.totalorder %s72, %s74
      %p78 = scmp.eq.s32.totalorder %s17, 0
      %p79 = por %p77, %p78
      %p80 = scmp.ne.s32.totalorder %s72, %s74
      %p81 = scmp.eq.s32.totalorder %s22, 1
      %p82 = por %p80, %p81
      %p83 = scmp.ne.s32.totalorder %s74, %s75
      %p84 = scmp.eq.s32.totalorder %s22, 0
      %p85 = por %p83, %p84
      %p86 = scmp.ne.s32.totalorder %s74, %s75
      %p87 = scmp.eq.s32.totalorder %s23, 1
      %p88 = por %p86, %p87
      %p90 = scmp.ne.s32.totalorder %s75, %s89
      %p91 = scmp.eq.s32.totalorder %s23, 0
      %p92 = por %p90, %p91
      %s94 = sadd.s32 %s93, 1
      %p97 = scmp.eq.s32.totalorder %s17, 1
      %p98 = scmp.ne.s32.totalorder %s93, %s95
      %p99 = scmp.eq.s32.totalorder %s17, 0
      %p100 = por %p98, %p99
      %p101 = scmp.ne.s32.totalorder %s93, %s95
      %p102 = scmp.eq.s32.totalorder %s22, 1
      %p103 = por %p101, %p102
      %p104 = scmp.ne.s32.totalorder %s95, %s96
      %p105 = scmp.eq.s32.totalorder %s22, 0
      %p106 = por %p104, %p105
      %p107 = scmp.ne.s32.totalorder %s95, %s96
      %p108 = scmp.eq.s32.totalorder %s23, 1
      %p109 = por %p107, %p108
      %p111 = scmp.ne.s32.totalorder %s96, %s110
      %p112 = scmp.eq.s32.totalorder %s23, 0
      %p113 = por %p111, %p112
      %s115 = sadd.s32 %s114, 1
      %p118 = scmp.eq.s32.totalorder %s17, 1
      %p119 = scmp.ne.s32.totalorder %s114, %s116
      %p120 = scmp.eq.s32.totalorder %s17, 0
      %p121 = por %p119, %p120
      %p122 = scmp.ne.s32.totalorder %s114, %s116
      %p123 = scmp.eq.s32.totalorder %s22, 1
      %p124 = por %p122, %p123
      %p125 = scmp.ne.s32.totalorder %s116, %s117
      %p126 = scmp.eq.s32.totalorder %s22, 0
      %p127 = por %p125, %p126
      %p128 = scmp.ne.s32.totalorder %s116, %s117
      %p129 = scmp.eq.s32.totalorder %s23, 1
      %p130 = por %p128, %p129
      %p132 = scmp.ne.s32.totalorder %s117, %s131
      %p133 = scmp.eq.s32.totalorder %s23, 0
      %p134 = por %p132, %p133
      %s136 = sadd.s32 %s135, 1
      %p139 = scmp.eq.s32.totalorder %s17, 1
      %p140 = scmp.ne.s32.totalorder %s135, %s137
      %p141 = scmp.eq.s32.totalorder %s17, 0
      %p142 = por %p140, %p141
      %p143 = scmp.ne.s32.totalorder %s135, %s137
      %p144 = scmp.eq.s32.totalorder %s22, 1
      %p145 = por %p143, %p144
      %p146 = scmp.ne.s32.totalorder %s137, %s138
      %p147 = scmp.eq.s32.totalorder %s22, 0
      %p148 = por %p146, %p147
      %p149 = scmp.ne.s32.totalorder %s137, %s138
      %p150 = scmp.eq.s32.totalorder %s23, 1
      %p151 = por %p149, %p150
      %p153 = scmp.ne.s32.totalorder %s138, %s152
      %p154 = scmp.eq.s32.totalorder %s23, 0
      %p155 = por %p153, %p154
      %s157 = sadd.s32 %s156, 1
      %p160 = scmp.eq.s32.totalorder %s17, 1
      %p161 = scmp.ne.s32.totalorder %s156, %s158
      %p162 = scmp.eq.s32.totalorder %s17, 0
      %p163 = por %p161, %p162
      %p164 = scmp.ne.s32.totalorder %s156, %s158
      %p165 = scmp.eq.s32.totalorder %s22, 1
      %p166 = por %p164, %p165
      %p167 = scmp.ne.s32.totalorder %s158, %s159
      %p168 = scmp.eq.s32.totalorder %s22, 0
      %p169 = por %p167, %p168
      %p170 = scmp.ne.s32.totalorder %s158, %s159
      %p171 = scmp.eq.s32.totalorder %s23, 1
      %p172 = por %p170, %p171
      %p174 = scmp.ne.s32.totalorder %s159, %s173
      %p175 = scmp.eq.s32.totalorder %s23, 0
      %p176 = por %p174, %p175
      %s177 = ssub.s32 %s17, %s24
      %p178 = scmp.eq.s32.totalorder %s177, 0
      %s180 = sadd.s32 %s179, 1
      %s181 = scalar_select %p178, %s179, %s180
      %p184 = pneg %p178
      %p185 = scmp.eq.s32.totalorder %s17, 1
      %p186 = por %p184, %p185
      %p187 = scmp.ne.s32.totalorder %s179, %s182
      %p188 = scmp.eq.s32.totalorder %s17, 0
      %p189 = por %p187, %p188
      %p190 = scmp.ne.s32.totalorder %s179, %s182
      %p191 = scmp.eq.s32.totalorder %s22, 1
      %p192 = por %p190, %p191
      %p193 = scmp.ne.s32.totalorder %s182, %s183
      %p194 = scmp.eq.s32.totalorder %s22, 0
      %p195 = por %p193, %p194
      %p196 = scmp.ne.s32.totalorder %s182, %s183
      %p197 = scmp.eq.s32.totalorder %s23, 1
      %p198 = por %p196, %p197
      %p200 = scmp.ne.s32.totalorder %s183, %s199
      %p201 = scmp.eq.s32.totalorder %s23, 0
      %p202 = por %p200, %p201
      %p203 = scmp.le.s32.totalorder 1, %s17
      %p204 = scmp.lt.s32.totalorder %s17, 3
      %p205 = pnand %p203, %p204
      %p206 = pneg %p205
      // Predicated region
      $region9: #{tpu_custom_call.1} parent=5 // pred_check
        _
      $region10: #{tpu_custom_call.1} parent=5 // pred_check_branch
        %208 = sbr.rel (%p205) target = $region12
      $region11: #{tpu_custom_call.1} parent=5 // pred_region
        %s209 = ssub.s32 %s17, 1
        // Predicated region
        $region13: #{tpu_custom_call.1} parent=11 // pred_check
          %p210 = pneg %p64
        $region14: #{tpu_custom_call.1} parent=11 // pred_check_branch
          %212 = sbr.rel (%p210) target = $region16
        $region15: #{tpu_custom_call.1} parent=11 // pred_region
          _
        $region16: #{tpu_custom_call.1} parent=11 // pred_fallthru
          _
        // Predicated region
        $region17: #{tpu_custom_call.1} parent=11 // pred_check
          %p213 = pneg %p85
        $region18: #{tpu_custom_call.1} parent=11 // pred_check_branch
          %215 = sbr.rel (%p213) target = $region20
        $region19: #{tpu_custom_call.1} parent=11 // pred_region
          _
        $region20: #{tpu_custom_call.1} parent=11 // pred_fallthru
          _
        // Predicated region
        $region21: #{tpu_custom_call.1} parent=11 // pred_check
          %p216 = pneg %p106
        $region22: #{tpu_custom_call.1} parent=11 // pred_check_branch
          %218 = sbr.rel (%p216) target = $region24
        $region23: #{tpu_custom_call.1} parent=11 // pred_region
          _
        $region24: #{tpu_custom_call.1} parent=11 // pred_fallthru
          _
        // Predicated region
        $region25: #{tpu_custom_call.1} parent=11 // pred_check
          %p219 = pneg %p127
        $region26: #{tpu_custom_call.1} parent=11 // pred_check_branch
          %221 = sbr.rel (%p219) target = $region28
        $region27: #{tpu_custom_call.1} parent=11 // pred_region
          _
        $region28: #{tpu_custom_call.1} parent=11 // pred_fallthru
          _
        // Predicated region
        $region29: #{tpu_custom_call.1} parent=11 // pred_check
          %p222 = pneg %p148
        $region30: #{tpu_custom_call.1} parent=11 // pred_check_branch
          %224 = sbr.rel (%p222) target = $region32
        $region31: #{tpu_custom_call.1} parent=11 // pred_region
          _
        $region32: #{tpu_custom_call.1} parent=11 // pred_fallthru
          _
        // Predicated region
        $region33: #{tpu_custom_call.1} parent=11 // pred_check
          %p225 = pneg %p169
        $region34: #{tpu_custom_call.1} parent=11 // pred_check_branch
          %227 = sbr.rel (%p225) target = $region36
        $region35: #{tpu_custom_call.1} parent=11 // pred_region
          _
        $region36: #{tpu_custom_call.1} parent=11 // pred_fallthru
          _
      $region12: #{tpu_custom_call.1} parent=5 // pred_fallthru
        _
      %p228 = scmp.lt.s32.totalorder %s17, 2
      // Predicated region
      $region37: #{tpu_custom_call.1} parent=5 // pred_check
        %p229 = pneg %p228
      $region38: #{tpu_custom_call.1} parent=5 // pred_check_branch
        %231 = sbr.rel (%p229) target = $region40
      $region39: #{tpu_custom_call.1} parent=5 // pred_region
        // Predicated region
        $region41: #{tpu_custom_call.1} parent=39 // pred_check
          %p232 = pneg %p37
        $region42: #{tpu_custom_call.1} parent=39 // pred_check_branch
          %234 = sbr.rel (%p232) target = $region44
        $region43: #{tpu_custom_call.1} parent=39 // pred_region
          %s235 = smul.u32 4, %s17
          %p236 = scmp.lt.s32.totalorder %s235, 7
          %s237 = scalar_select %p236, %s235, 7
          %s238 = scalar_lea.vmem %s0, %s237
          %s239 = smul.u32 4, %s17
        $region44: #{tpu_custom_call.1} parent=39 // pred_fallthru
          _
      $region40: #{tpu_custom_call.1} parent=5 // pred_fallthru
        _
      %p240 = scmp.le.s32.totalorder 1, %s17
      %p241 = scmp.lt.s32.totalorder %s17, 3
      %p242 = pnand %p240, %p241
      %p243 = pneg %p242
      // Predicated region
      $region45: #{tpu_custom_call.1} parent=5 // pred_check
        _
      $region46: #{tpu_custom_call.1} parent=5 // pred_check_branch
        %245 = sbr.rel (%p242) target = $region48
      $region47: #{tpu_custom_call.1} parent=5 // pred_region
        %s246 = ssub.s32 %s17, 1
        %s247 = smul.u32 4, %s22
        %p248 = scmp.lt.s32.totalorder %s247, 7
        %s249 = scalar_select %p248, %s247, 7
        %s250 = scalar_lea.vmem %s0, %s249
        %p251 = pneg %p43
        %p252 = pneg %p40
        %p253 = pneg %p64
        %p254 = pneg %p61
        %p255 = pneg %p85
        %p256 = pneg %p82
        %p257 = pneg %p106
        %p258 = pneg %p103
        %p259 = pneg %p127
        %p260 = pneg %p124
        %p261 = pneg %p148
        %p262 = pneg %p145
        %p263 = pneg %p169
        %p264 = pneg %p166
        %p265 = pneg %p195
        %p266 = pneg %p192
        %s267 = sand.u32 %s182, 1
        %s268 = scalar_lea.sflag [#allocation4], %s267
        %s269 = sand.u32 %s182, 1
        %s270 = smul.addr %s269, 4
        %s271 = scalar_lea.vmem [#allocation3], %s270
        %s272 = smul.u32 4, %s22
        %p273 = scmp.lt.s32.totalorder %s272, 7
        %s274 = scalar_select %p273, %s272, 7
        %s275 = scalar_lea.vmem %s0, %s274
        %s276 = smul.u32 4, %s22
        %s277 = smul.u32 4, %s22
        %v278 = vld [vmem:[%s275] sm:$0xf]
        %v279 = vld [vmem:[%s1] sm:$0xff]
        %v280 = vld [vmem:[%s1 + $0x8] sm:$0xff]
        %v281 = vld [vmem:[%s1 + $0x10] sm:$0xf]
        %283 = vset.pattern.permute.xlu0 0
        %284 = vperm.xlu0 %283, %v279
        %v285 = vpop.permute.xlu0 %284
        %288 = vset.pattern.permute.xlu0 0
        %289 = vperm.xlu0 %288, %v280
        %v290 = vpop.permute.xlu0 %289
        %293 = vset.pattern.permute.xlu0 0
        %294 = vperm.xlu0 %293, %v281
        %v295 = vpop.permute.xlu0 %294
        %v298 = vlaneseq
        %v299 = vshrl.u32 %v298, 7
        %v300 = vsub.s32 0, %v299
        %v301 = vrot.slane %v278, %v300
        %v302 = vlaneseq
        %v303 = vshrl.u32 %v302, 7
        %v304 = vsub.s32 1, %v303
        %v305 = vrot.slane %v278, %v304
        %v306 = vlaneseq
        %v307 = vshrl.u32 %v306, 7
        %v308 = vsub.s32 2, %v307
        %v309 = vrot.slane %v278, %v308
        %v310 = vlaneseq
        %v311 = vshrl.u32 %v310, 7
        %v312 = vsub.s32 3, %v311
        %v313 = vrot.slane %v278, %v312
        %v318 = vmul.f32 %v285, %v301
        %v319 = vmul.f32 %v285, %v305
        %v320 = vmul.f32 %v285, %v309
        %v321 = vmul.f32 %v285, %v313
        %v322 = vmul.f32 %v290, %v301
        %v323 = vmul.f32 %v290, %v305
        %v324 = vmul.f32 %v290, %v309
        %v325 = vmul.f32 %v290, %v313
        %v326 = vmul.f32 %v295, %v301
        %v327 = vmul.f32 %v295, %v305
        %v328 = vmul.f32 %v295, %v309
        %v329 = vmul.f32 %v295, %v313
        %v330 = vld [vmem:[%s2] sm:$0xff]
        %v331 = vld [vmem:[%s2 + $0x8] sm:$0xff]
        %v332 = vld [vmem:[%s2 + $0x10] sm:$0xf]
        %334 = vset.pattern.permute.xlu0 0
        %335 = vperm.xlu0 %334, %v330
        %v336 = vpop.permute.xlu0 %335
        %339 = vset.pattern.permute.xlu0 0
        %340 = vperm.xlu0 %339, %v331
        %v341 = vpop.permute.xlu0 %340
        %344 = vset.pattern.permute.xlu0 0
        %345 = vperm.xlu0 %344, %v332
        %v346 = vpop.permute.xlu0 %345
        %v348 = vadd.f32 %v318, %v336
        %v349 = vadd.f32 %v319, %v336
        %v350 = vadd.f32 %v320, %v336
        %v351 = vadd.f32 %v321, %v336
        %v352 = vadd.f32 %v322, %v341
        %v353 = vadd.f32 %v323, %v341
        %v354 = vadd.f32 %v324, %v341
        %v355 = vadd.f32 %v325, %v341
        %v356 = vadd.f32 %v326, %v346
        %v357 = vadd.f32 %v327, %v346
        %v358 = vadd.f32 %v328, %v346
        %v359 = vadd.f32 %v329, %v346
        %v360 = vtanh.pop %v348
        %v361 = vtanh.pop %v349
        %v362 = vtanh.pop %v350
        %v363 = vtanh.pop %v351
        %v364 = vtanh.pop %v352
        %v365 = vtanh.pop %v353
        %v366 = vtanh.pop %v354
        %v367 = vtanh.pop %v355
        %v368 = vtanh.pop %v356
        %v369 = vtanh.pop %v357
        %v370 = vtanh.pop %v358
        %v371 = vtanh.pop %v359
        %v372 = vld [vmem:[%s3] sm:$0xff]
        %v373 = vld [vmem:[%s3 + $0x8] sm:$0xff]
        %v374 = vld [vmem:[%s3 + $0x10] sm:$0xf]
        %v375 = vld [vmem:[%s4] sm:$0xff]
        %v376 = vld [vmem:[%s4 + $0x8] sm:$0xff]
        %v377 = vld [vmem:[%s4 + $0x10] sm:$0xf]
        %379 = vset.pattern.permute.xlu0 0
        %380 = vperm.xlu0 %379, %v375
        %v381 = vpop.permute.xlu0 %380
        %384 = vset.pattern.permute.xlu0 0
        %385 = vperm.xlu0 %384, %v376
        %v386 = vpop.permute.xlu0 %385
        %389 = vset.pattern.permute.xlu0 0
        %390 = vperm.xlu0 %389, %v377
        %v391 = vpop.permute.xlu0 %390
        %vm393 = vcmask 162816
        %v395 = vsel %vm393, %v372, 0
        %v398 = vsel %vm393, %v373, 0
        %v401 = vsel %vm393, %v374, 0
        %vm403 = vcmask 1043456
        %v405 = vsel %vm403, %v368, 0
        %v408 = vsel %vm403, %v369, 0
        %v411 = vsel %vm403, %v370, 0
        %v414 = vsel %vm403, %v371, 0
        %416 = vmatprep.subr.mxu0 %v361
        %417 = vmatpush1.msra.mxu0 %v360
        %418 = vmatprep.subr.mxu0 %v365
        %419 = vmatpush1.msra.mxu0 %v364
        %420 = vmatprep.subr.mxu0 %v408
        %421 = vmatpush1.msra.mxu0 %v405
        %422 = vmatprep.subr.mxu0 0.0
        %423 = vmatpush1.msra.mxu0 0.0
        %424 = vmatprep.subr.mxu0 0.0
        %425 = vmatpush1.msra.mxu0 0.0
        %426 = vmatprep.subr.mxu0 0.0
        %427 = vmatpush1.msra.mxu0 0.0
        %428 = vmatprep.subr.mxu0 0.0
        %429 = vmatpush1.msra.mxu0 0.0
        %430 = vmatprep.subr.mxu0 0.0
        %431 = vmatpush1.msra.mxu0 0.0
        %432 = vmatprep.subr.mxu0 0.0
        %433 = vmatpush1.msra.mxu0 0.0
        %434 = vmatprep.subr.mxu0 0.0
        %435 = vmatpush1.msra.mxu0 0.0
        %436 = vmatprep.subr.mxu0 0.0
        %437 = vmatpush1.msra.mxu0 0.0
        %438 = vmatprep.subr.mxu0 0.0
        %439 = vmatpush1.msra.mxu0 0.0
        %440 = vmatprep.subr.mxu0 0.0
        %441 = vmatpush1.msra.mxu0 0.0
        %442 = vmatprep.subr.mxu0 0.0
        %443 = vmatpush1.msra.mxu0 0.0
        %444 = vmatprep.subr.mxu0 0.0
        %445 = vmatpush1.msra.mxu0 0.0
        %446 = vmatprep.subr.mxu0 0.0
        %447 = vmatpush1.msra.mxu0 0.0
        %448 = vmatprep.subr.mxu0 0.0
        %449 = vmatpush1.msra.mxu0 0.0
        %450 = vmatprep.subr.mxu0 0.0
        %451 = vmatpush1.msra.mxu0 0.0
        %452 = vmatprep.subr.mxu0 0.0
        %453 = vmatpush1.msra.mxu0 0.0
        %454 = vmatprep.subr.mxu0 0.0
        %455 = vmatpush1.msra.mxu0 0.0
        %456 = vmatprep.subr.mxu0 0.0
        %457 = vmatpush1.msra.mxu0 0.0
        %458 = vmatprep.subr.mxu0 0.0
        %459 = vmatpush1.msra.mxu0 0.0
        %460 = vmatprep.subr.mxu0 0.0
        %461 = vmatpush1.msra.mxu0 0.0
        %462 = vmatprep.subr.mxu0 0.0
        %463 = vmatpush1.msra.mxu0 0.0
        %464 = vmatprep.subr.mxu0 0.0
        %465 = vmatpush1.msra.mxu0 0.0
        %466 = vmatprep.subr.mxu0 0.0
        %467 = vmatpush1.msra.mxu0 0.0
        %468 = vmatprep.subr.mxu0 0.0
        %469 = vmatpush1.msra.mxu0 0.0
        %470 = vmatprep.subr.mxu0 0.0
        %471 = vmatpush1.msra.mxu0 0.0
        %472 = vmatprep.subr.mxu0 0.0
        %473 = vmatpush1.msra.mxu0 0.0
        %474 = vmatprep.subr.mxu0 0.0
        %475 = vmatpush1.msra.mxu0 0.0
        %476 = vmatprep.subr.mxu0 0.0
        %477 = vmatpush1.msra.mxu0 0.0
        %478 = vmatprep.subr.mxu0 0.0
        %479 = vmatpush1.msra.mxu0 0.0
        %480 = vmatprep.mubr.f32.mxu0 0.0
        %481 = vmatmul.mubr.f32.gmra.mrb[0].mxu0 %v395
        %v482 = vpop.f32.mrb[0].mxu0
        %v483 = vadd.f32 %v381, %v482
        %v484 = vpop.f32.mrb[0].mxu0
        %v485 = vadd.f32 %v381, %v484
        %486 = vmatprep.mubr.f32.mxu0 0.0
        %487 = vmatmul.mubr.f32.gmra.mrb[0].mxu0 %v398
        %v488 = vpop.f32.mrb[0].mxu0
        %v489 = vadd.f32 %v386, %v488
        %v490 = vpop.f32.mrb[0].mxu0
        %v491 = vadd.f32 %v386, %v490
        %492 = vmatprep.mubr.f32.mxu0 0.0
        %493 = vmatmul.mubr.f32.gmra.mrb[0].mxu0 %v401
        %v494 = vpop.f32.mrb[0].mxu0
        %v495 = vadd.f32 %v391, %v494
        %v496 = vpop.f32.mrb[0].mxu0
        %v497 = vadd.f32 %v391, %v496
        %498 = vdwg.mxu0
        %499 = vmatprep.subr.mxu0 %v363
        %500 = vmatpush1.msra.mxu0 %v362
        %501 = vmatprep.subr.mxu0 %v367
        %502 = vmatpush1.msra.mxu0 %v366
        %503 = vmatprep.subr.mxu0 %v414
        %504 = vmatpush1.msra.mxu0 %v411
        %505 = vmatprep.subr.mxu0 0.0
        %506 = vmatpush1.msra.mxu0 0.0
        %507 = vmatprep.subr.mxu0 0.0
        %508 = vmatpush1.msra.mxu0 0.0
        %509 = vmatprep.subr.mxu0 0.0
        %510 = vmatpush1.msra.mxu0 0.0
        %511 = vmatprep.subr.mxu0 0.0
        %512 = vmatpush1.msra.mxu0 0.0
        %513 = vmatprep.subr.mxu0 0.0
        %514 = vmatpush1.msra.mxu0 0.0
        %515 = vmatprep.subr.mxu0 0.0
        %516 = vmatpush1.msra.mxu0 0.0
        %517 = vmatprep.subr.mxu0 0.0
        %518 = vmatpush1.msra.mxu0 0.0
        %519 = vmatprep.subr.mxu0 0.0
        %520 = vmatpush1.msra.mxu0 0.0
        %521 = vmatprep.subr.mxu0 0.0
        %522 = vmatpush1.msra.mxu0 0.0
        %523 = vmatprep.subr.mxu0 0.0
        %524 = vmatpush1.msra.mxu0 0.0
        %525 = vmatprep.subr.mxu0 0.0
        %526 = vmatpush1.msra.mxu0 0.0
        %527 = vmatprep.subr.mxu0 0.0
        %528 = vmatpush1.msra.mxu0 0.0
        %529 = vmatprep.subr.mxu0 0.0
        %530 = vmatpush1.msra.mxu0 0.0
        %531 = vmatprep.subr.mxu0 0.0
        %532 = vmatpush1.msra.mxu0 0.0
        %533 = vmatprep.subr.mxu0 0.0
        %534 = vmatpush1.msra.mxu0 0.0
        %535 = vmatprep.subr.mxu0 0.0
        %536 = vmatpush1.msra.mxu0 0.0
        %537 = vmatprep.subr.mxu0 0.0
        %538 = vmatpush1.msra.mxu0 0.0
        %539 = vmatprep.subr.mxu0 0.0
        %540 = vmatpush1.msra.mxu0 0.0
        %541 = vmatprep.subr.mxu0 0.0
        %542 = vmatpush1.msra.mxu0 0.0
        %543 = vmatprep.subr.mxu0 0.0
        %544 = vmatpush1.msra.mxu0 0.0
        %545 = vmatprep.subr.mxu0 0.0
        %546 = vmatpush1.msra.mxu0 0.0
        %547 = vmatprep.subr.mxu0 0.0
        %548 = vmatpush1.msra.mxu0 0.0
        %549 = vmatprep.subr.mxu0 0.0
        %550 = vmatpush1.msra.mxu0 0.0
        %551 = vmatprep.subr.mxu0 0.0
        %552 = vmatpush1.msra.mxu0 0.0
        %553 = vmatprep.subr.mxu0 0.0
        %554 = vmatpush1.msra.mxu0 0.0
        %555 = vmatprep.subr.mxu0 0.0
        %556 = vmatpush1.msra.mxu0 0.0
        %557 = vmatprep.subr.mxu0 0.0
        %558 = vmatpush1.msra.mxu0 0.0
        %559 = vmatprep.subr.mxu0 0.0
        %560 = vmatpush1.msra.mxu0 0.0
        %561 = vmatprep.subr.mxu0 0.0
        %562 = vmatpush1.msra.mxu0 0.0
        %563 = vmatprep.mubr.f32.mxu0 0.0
        %564 = vmatmul.mubr.f32.gmra.mrb[0].mxu0 %v395
        %v565 = vpop.f32.mrb[0].mxu0
        %v566 = vadd.f32 %v381, %v565
        %v567 = vpop.f32.mrb[0].mxu0
        %v568 = vadd.f32 %v381, %v567
        %569 = vmatprep.mubr.f32.mxu0 0.0
        %570 = vmatmul.mubr.f32.gmra.mrb[0].mxu0 %v398
        %v571 = vpop.f32.mrb[0].mxu0
        %v572 = vadd.f32 %v386, %v571
        %v573 = vpop.f32.mrb[0].mxu0
        %v574 = vadd.f32 %v386, %v573
        %575 = vmatprep.mubr.f32.mxu0 0.0
        %576 = vmatmul.mubr.f32.gmra.mrb[0].mxu0 %v401
        %v577 = vpop.f32.mrb[0].mxu0
        %v578 = vadd.f32 %v391, %v577
        %v579 = vpop.f32.mrb[0].mxu0
        %v580 = vadd.f32 %v391, %v579
        %581 = vdwg.mxu0
        %v582 = vtanh.pop %v483
        %v583 = vtanh.pop %v485
        %v584 = vtanh.pop %v566
        %v585 = vtanh.pop %v568
        %v586 = vtanh.pop %v489
        %v587 = vtanh.pop %v491
        %v588 = vtanh.pop %v572
        %v589 = vtanh.pop %v574
        %v590 = vtanh.pop %v495
        %v591 = vtanh.pop %v497
        %v592 = vtanh.pop %v578
        %v593 = vtanh.pop %v580
        %s594 = scalar_lea.vmem %s3, 24
        %v595 = vld [vmem:[%s594] sm:$0xff]
        %v596 = vld [vmem:[%s594 + $0x8] sm:$0xff]
        %v597 = vld [vmem:[%s594 + $0x10] sm:$0xf]
        %s598 = scalar_lea.vmem %s4, 24
        %v599 = vld [vmem:[%s598] sm:$0xff]
        %v600 = vld [vmem:[%s598 + $0x8] sm:$0xff]
        %v601 = vld [vmem:[%s598 + $0x10] sm:$0xf]
        %603 = vset.pattern.permute.xlu0 0
        %604 = vperm.xlu0 %603, %v599
        %v605 = vpop.permute.xlu0 %604
        %608 = vset.pattern.permute.xlu0 0
        %609 = vperm.xlu0 %608, %v600
        %v610 = vpop.permute.xlu0 %609
        %613 = vset.pattern.permute.xlu0 0
        %614 = vperm.xlu0 %613, %v601
        %v615 = vpop.permute.xlu0 %614
        %v618 = vsel %vm393, %v595, 0
        %v621 = vsel %vm393, %v596, 0
        %v624 = vsel %vm393, %v597, 0
        %v627 = vsel %vm403, %v590, 0
        %v630 = vsel %vm403, %v591, 0
        %v633 = vsel %vm403, %v592, 0
        %v636 = vsel %vm403, %v593, 0
        %638 = vmatprep.subr.mxu0 %v583
        %639 = vmatpush1.msra.mxu0 %v582
        %640 = vmatprep.subr.mxu0 %v587
        %641 = vmatpush1.msra.mxu0 %v586
        %642 = vmatprep.subr.mxu0 %v630
        %643 = vmatpush1.msra.mxu0 %v627
        %644 = vmatprep.subr.mxu0 0.0
        %645 = vmatpush1.msra.mxu0 0.0
        %646 = vmatprep.subr.mxu0 0.0
        %647 = vmatpush1.msra.mxu0 0.0
        %648 = vmatprep.subr.mxu0 0.0
        %649 = vmatpush1.msra.mxu0 0.0
        %650 = vmatprep.subr.mxu0 0.0
        %651 = vmatpush1.msra.mxu0 0.0
        %652 = vmatprep.subr.mxu0 0.0
        %653 = vmatpush1.msra.mxu0 0.0
        %654 = vmatprep.subr.mxu0 0.0
        %655 = vmatpush1.msra.mxu0 0.0
        %656 = vmatprep.subr.mxu0 0.0
        %657 = vmatpush1.msra.mxu0 0.0
        %658 = vmatprep.subr.mxu0 0.0
        %659 = vmatpush1.msra.mxu0 0.0
        %660 = vmatprep.subr.mxu0 0.0
        %661 = vmatpush1.msra.mxu0 0.0
        %662 = vmatprep.subr.mxu0 0.0
        %663 = vmatpush1.msra.mxu0 0.0
        %664 = vmatprep.subr.mxu0 0.0
        %665 = vmatpush1.msra.mxu0 0.0
        %666 = vmatprep.subr.mxu0 0.0
        %667 = vmatpush1.msra.mxu0 0.0
        %668 = vmatprep.subr.mxu0 0.0
        %669 = vmatpush1.msra.mxu0 0.0
        %670 = vmatprep.subr.mxu0 0.0
        %671 = vmatpush1.msra.mxu0 0.0
        %672 = vmatprep.subr.mxu0 0.0
        %673 = vmatpush1.msra.mxu0 0.0
        %674 = vmatprep.subr.mxu0 0.0
        %675 = vmatpush1.msra.mxu0 0.0
        %676 = vmatprep.subr.mxu0 0.0
        %677 = vmatpush1.msra.mxu0 0.0
        %678 = vmatprep.subr.mxu0 0.0
        %679 = vmatpush1.msra.mxu0 0.0
        %680 = vmatprep.subr.mxu0 0.0
        %681 = vmatpush1.msra.mxu0 0.0
        %682 = vmatprep.subr.mxu0 0.0
        %683 = vmatpush1.msra.mxu0 0.0
        %684 = vmatprep.subr.mxu0 0.0
        %685 = vmatpush1.msra.mxu0 0.0
        %686 = vmatprep.subr.mxu0 0.0
        %687 = vmatpush1.msra.mxu0 0.0
        %688 = vmatprep.subr.mxu0 0.0
        %689 = vmatpush1.msra.mxu0 0.0
        %690 = vmatprep.subr.mxu0 0.0
        %691 = vmatpush1.msra.mxu0 0.0
        %692 = vmatprep.subr.mxu0 0.0
        %693 = vmatpush1.msra.mxu0 0.0
        %694 = vmatprep.subr.mxu0 0.0
        %695 = vmatpush1.msra.mxu0 0.0
        %696 = vmatprep.subr.mxu0 0.0
        %697 = vmatpush1.msra.mxu0 0.0
        %698 = vmatprep.subr.mxu0 0.0
        %699 = vmatpush1.msra.mxu0 0.0
        %700 = vmatprep.subr.mxu0 0.0
        %701 = vmatpush1.msra.mxu0 0.0
        %702 = vmatprep.mubr.f32.mxu0 0.0
        %703 = vmatmul.mubr.f32.gmra.mrb[0].mxu0 %v618
        %v704 = vpop.f32.mrb[0].mxu0
        %v705 = vadd.f32 %v605, %v704
        %v706 = vpop.f32.mrb[0].mxu0
        %v707 = vadd.f32 %v605, %v706
        %708 = vmatprep.mubr.f32.mxu0 0.0
        %709 = vmatmul.mubr.f32.gmra.mrb[0].mxu0 %v621
        %v710 = vpop.f32.mrb[0].mxu0
        %v711 = vadd.f32 %v610, %v710
        %v712 = vpop.f32.mrb[0].mxu0
        %v713 = vadd.f32 %v610, %v712
        %714 = vmatprep.mubr.f32.mxu0 0.0
        %715 = vmatmul.mubr.f32.gmra.mrb[0].mxu0 %v624
        %v716 = vpop.f32.mrb[0].mxu0
        %v717 = vadd.f32 %v615, %v716
        %v718 = vpop.f32.mrb[0].mxu0
        %v719 = vadd.f32 %v615, %v718
        %720 = vdwg.mxu0
        %721 = vmatprep.subr.mxu0 %v585
        %722 = vmatpush1.msra.mxu0 %v584
        %723 = vmatprep.subr.mxu0 %v589
        %724 = vmatpush1.msra.mxu0 %v588
        %725 = vmatprep.subr.mxu0 %v636
        %726 = vmatpush1.msra.mxu0 %v633
        %727 = vmatprep.subr.mxu0 0.0
        %728 = vmatpush1.msra.mxu0 0.0
        %729 = vmatprep.subr.mxu0 0.0
        %730 = vmatpush1.msra.mxu0 0.0
        %731 = vmatprep.subr.mxu0 0.0
        %732 = vmatpush1.msra.mxu0 0.0
        %733 = vmatprep.subr.mxu0 0.0
        %734 = vmatpush1.msra.mxu0 0.0
        %735 = vmatprep.subr.mxu0 0.0
        %736 = vmatpush1.msra.mxu0 0.0
        %737 = vmatprep.subr.mxu0 0.0
        %738 = vmatpush1.msra.mxu0 0.0
        %739 = vmatprep.subr.mxu0 0.0
        %740 = vmatpush1.msra.mxu0 0.0
        %741 = vmatprep.subr.mxu0 0.0
        %742 = vmatpush1.msra.mxu0 0.0
        %743 = vmatprep.subr.mxu0 0.0
        %744 = vmatpush1.msra.mxu0 0.0
        %745 = vmatprep.subr.mxu0 0.0
        %746 = vmatpush1.msra.mxu0 0.0
        %747 = vmatprep.subr.mxu0 0.0
        %748 = vmatpush1.msra.mxu0 0.0
        %749 = vmatprep.subr.mxu0 0.0
        %750 = vmatpush1.msra.mxu0 0.0
        %751 = vmatprep.subr.mxu0 0.0
        %752 = vmatpush1.msra.mxu0 0.0
        %753 = vmatprep.subr.mxu0 0.0
        %754 = vmatpush1.msra.mxu0 0.0
        %755 = vmatprep.subr.mxu0 0.0
        %756 = vmatpush1.msra.mxu0 0.0
        %757 = vmatprep.subr.mxu0 0.0
        %758 = vmatpush1.msra.mxu0 0.0
        %759 = vmatprep.subr.mxu0 0.0
        %760 = vmatpush1.msra.mxu0 0.0
        %761 = vmatprep.subr.mxu0 0.0
        %762 = vmatpush1.msra.mxu0 0.0
        %763 = vmatprep.subr.mxu0 0.0
        %764 = vmatpush1.msra.mxu0 0.0
        %765 = vmatprep.subr.mxu0 0.0
        %766 = vmatpush1.msra.mxu0 0.0
        %767 = vmatprep.subr.mxu0 0.0
        %768 = vmatpush1.msra.mxu0 0.0
        %769 = vmatprep.subr.mxu0 0.0
        %770 = vmatpush1.msra.mxu0 0.0
        %771 = vmatprep.subr.mxu0 0.0
        %772 = vmatpush1.msra.mxu0 0.0
        %773 = vmatprep.subr.mxu0 0.0
        %774 = vmatpush1.msra.mxu0 0.0
        %775 = vmatprep.subr.mxu0 0.0
        %776 = vmatpush1.msra.mxu0 0.0
        %777 = vmatprep.subr.mxu0 0.0
        %778 = vmatpush1.msra.mxu0 0.0
        %779 = vmatprep.subr.mxu0 0.0
        %780 = vmatpush1.msra.mxu0 0.0
        %781 = vmatprep.subr.mxu0 0.0
        %782 = vmatpush1.msra.mxu0 0.0
        %783 = vmatprep.subr.mxu0 0.0
        %784 = vmatpush1.msra.mxu0 0.0
        %785 = vmatprep.mubr.f32.mxu0 0.0
        %786 = vmatmul.mubr.f32.gmra.mrb[0].mxu0 %v618
        %v787 = vpop.f32.mrb[0].mxu0
        %v788 = vadd.f32 %v605, %v787
        %v789 = vpop.f32.mrb[0].mxu0
        %v790 = vadd.f32 %v605, %v789
        %791 = vmatprep.mubr.f32.mxu0 0.0
        %792 = vmatmul.mubr.f32.gmra.mrb[0].mxu0 %v621
        %v793 = vpop.f32.mrb[0].mxu0
        %v794 = vadd.f32 %v610, %v793
        %v795 = vpop.f32.mrb[0].mxu0
        %v796 = vadd.f32 %v610, %v795
        %797 = vmatprep.mubr.f32.mxu0 0.0
        %798 = vmatmul.mubr.f32.gmra.mrb[0].mxu0 %v624
        %v799 = vpop.f32.mrb[0].mxu0
        %v800 = vadd.f32 %v615, %v799
        %v801 = vpop.f32.mrb[0].mxu0
        %v802 = vadd.f32 %v615, %v801
        %803 = vdwg.mxu0
        %v804 = vtanh.pop %v705
        %v805 = vtanh.pop %v707
        %v806 = vtanh.pop %v788
        %v807 = vtanh.pop %v790
        %v808 = vtanh.pop %v711
        %v809 = vtanh.pop %v713
        %v810 = vtanh.pop %v794
        %v811 = vtanh.pop %v796
        %v812 = vtanh.pop %v717
        %v813 = vtanh.pop %v719
        %v814 = vtanh.pop %v800
        %v815 = vtanh.pop %v802
        %s816 = scalar_lea.vmem %s3, 48
        %v817 = vld [vmem:[%s816] sm:$0xff]
        %v818 = vld [vmem:[%s816 + $0x8] sm:$0xff]
        %v819 = vld [vmem:[%s816 + $0x10] sm:$0xf]
        %s820 = scalar_lea.vmem %s4, 48
        %v821 = vld [vmem:[%s820] sm:$0xff]
        %v822 = vld [vmem:[%s820 + $0x8] sm:$0xff]
        %v823 = vld [vmem:[%s820 + $0x10] sm:$0xf]
        %825 = vset.pattern.permute.xlu0 0
        %826 = vperm.xlu0 %825, %v821
        %v827 = vpop.permute.xlu0 %826
        %830 = vset.pattern.permute.xlu0 0
        %831 = vperm.xlu0 %830, %v822
        %v832 = vpop.permute.xlu0 %831
        %835 = vset.pattern.permute.xlu0 0
        %836 = vperm.xlu0 %835, %v823
        %v837 = vpop.permute.xlu0 %836
        %v840 = vsel %vm393, %v817, 0
        %v843 = vsel %vm393, %v818, 0
        %v846 = vsel %vm393, %v819, 0
        %v849 = vsel %vm403, %v812, 0
        %v852 = vsel %vm403, %v813, 0
        %v855 = vsel %vm403, %v814, 0
        %v858 = vsel %vm403, %v815, 0
        %860 = vmatprep.subr.mxu0 %v805
        %861 = vmatpush1.msra.mxu0 %v804
        %862 = vmatprep.subr.mxu0 %v809
        %863 = vmatpush1.msra.mxu0 %v808
        %864 = vmatprep.subr.mxu0 %v852
        %865 = vmatpush1.msra.mxu0 %v849
        %866 = vmatprep.subr.mxu0 0.0
        %867 = vmatpush1.msra.mxu0 0.0
        %868 = vmatprep.subr.mxu0 0.0
        %869 = vmatpush1.msra.mxu0 0.0
        %870 = vmatprep.subr.mxu0 0.0
        %871 = vmatpush1.msra.mxu0 0.0
        %872 = vmatprep.subr.mxu0 0.0
        %873 = vmatpush1.msra.mxu0 0.0
        %874 = vmatprep.subr.mxu0 0.0
        %875 = vmatpush1.msra.mxu0 0.0
        %876 = vmatprep.subr.mxu0 0.0
        %877 = vmatpush1.msra.mxu0 0.0
        %878 = vmatprep.subr.mxu0 0.0
        %879 = vmatpush1.msra.mxu0 0.0
        %880 = vmatprep.subr.mxu0 0.0
        %881 = vmatpush1.msra.mxu0 0.0
        %882 = vmatprep.subr.mxu0 0.0
        %883 = vmatpush1.msra.mxu0 0.0
        %884 = vmatprep.subr.mxu0 0.0
        %885 = vmatpush1.msra.mxu0 0.0
        %886 = vmatprep.subr.mxu0 0.0
        %887 = vmatpush1.msra.mxu0 0.0
        %888 = vmatprep.subr.mxu0 0.0
        %889 = vmatpush1.msra.mxu0 0.0
        %890 = vmatprep.subr.mxu0 0.0
        %891 = vmatpush1.msra.mxu0 0.0
        %892 = vmatprep.subr.mxu0 0.0
        %893 = vmatpush1.msra.mxu0 0.0
        %894 = vmatprep.subr.mxu0 0.0
        %895 = vmatpush1.msra.mxu0 0.0
        %896 = vmatprep.subr.mxu0 0.0
        %897 = vmatpush1.msra.mxu0 0.0
        %898 = vmatprep.subr.mxu0 0.0
        %899 = vmatpush1.msra.mxu0 0.0
        %900 = vmatprep.subr.mxu0 0.0
        %901 = vmatpush1.msra.mxu0 0.0
        %902 = vmatprep.subr.mxu0 0.0
        %903 = vmatpush1.msra.mxu0 0.0
        %904 = vmatprep.subr.mxu0 0.0
        %905 = vmatpush1.msra.mxu0 0.0
        %906 = vmatprep.subr.mxu0 0.0
        %907 = vmatpush1.msra.mxu0 0.0
        %908 = vmatprep.subr.mxu0 0.0
        %909 = vmatpush1.msra.mxu0 0.0
        %910 = vmatprep.subr.mxu0 0.0
        %911 = vmatpush1.msra.mxu0 0.0
        %912 = vmatprep.subr.mxu0 0.0
        %913 = vmatpush1.msra.mxu0 0.0
        %914 = vmatprep.subr.mxu0 0.0
        %915 = vmatpush1.msra.mxu0 0.0
        %916 = vmatprep.subr.mxu0 0.0
        %917 = vmatpush1.msra.mxu0 0.0
        %918 = vmatprep.subr.mxu0 0.0
        %919 = vmatpush1.msra.mxu0 0.0
        %920 = vmatprep.subr.mxu0 0.0
        %921 = vmatpush1.msra.mxu0 0.0
        %922 = vmatprep.subr.mxu0 0.0
        %923 = vmatpush1.msra.mxu0 0.0
        %924 = vmatprep.mubr.f32.mxu0 0.0
        %925 = vmatmul.mubr.f32.gmra.mrb[0].mxu0 %v840
        %v926 = vpop.f32.mrb[0].mxu0
        %v927 = vadd.f32 %v827, %v926
        %v928 = vpop.f32.mrb[0].mxu0
        %v929 = vadd.f32 %v827, %v928
        %930 = vmatprep.mubr.f32.mxu0 0.0
        %931 = vmatmul.mubr.f32.gmra.mrb[0].mxu0 %v843
        %v932 = vpop.f32.mrb[0].mxu0
        %v933 = vadd.f32 %v832, %v932
        %v934 = vpop.f32.mrb[0].mxu0
        %v935 = vadd.f32 %v832, %v934
        %936 = vmatprep.mubr.f32.mxu0 0.0
        %937 = vmatmul.mubr.f32.gmra.mrb[0].mxu0 %v846
        %v938 = vpop.f32.mrb[0].mxu0
        %v939 = vadd.f32 %v837, %v938
        %v940 = vpop.f32.mrb[0].mxu0
        %v941 = vadd.f32 %v837, %v940
        %942 = vdwg.mxu0
        %943 = vmatprep.subr.mxu0 %v807
        %944 = vmatpush1.msra.mxu0 %v806
        %945 = vmatprep.subr.mxu0 %v811
        %946 = vmatpush1.msra.mxu0 %v810
        %947 = vmatprep.subr.mxu0 %v858
        %948 = vmatpush1.msra.mxu0 %v855
        %949 = vmatprep.subr.mxu0 0.0
        %950 = vmatpush1.msra.mxu0 0.0
        %951 = vmatprep.subr.mxu0 0.0
        %952 = vmatpush1.msra.mxu0 0.0
        %953 = vmatprep.subr.mxu0 0.0
        %954 = vmatpush1.msra.mxu0 0.0
        %955 = vmatprep.subr.mxu0 0.0
        %956 = vmatpush1.msra.mxu0 0.0
        %957 = vmatprep.subr.mxu0 0.0
        %958 = vmatpush1.msra.mxu0 0.0
        %959 = vmatprep.subr.mxu0 0.0
        %960 = vmatpush1.msra.mxu0 0.0
        %961 = vmatprep.subr.mxu0 0.0
        %962 = vmatpush1.msra.mxu0 0.0
        %963 = vmatprep.subr.mxu0 0.0
        %964 = vmatpush1.msra.mxu0 0.0
        %965 = vmatprep.subr.mxu0 0.0
        %966 = vmatpush1.msra.mxu0 0.0
        %967 = vmatprep.subr.mxu0 0.0
        %968 = vmatpush1.msra.mxu0 0.0
        %969 = vmatprep.subr.mxu0 0.0
        %970 = vmatpush1.msra.mxu0 0.0
        %971 = vmatprep.subr.mxu0 0.0
        %972 = vmatpush1.msra.mxu0 0.0
        %973 = vmatprep.subr.mxu0 0.0
        %974 = vmatpush1.msra.mxu0 0.0
        %975 = vmatprep.subr.mxu0 0.0
        %976 = vmatpush1.msra.mxu0 0.0
        %977 = vmatprep.subr.mxu0 0.0
        %978 = vmatpush1.msra.mxu0 0.0
        %979 = vmatprep.subr.mxu0 0.0
        %980 = vmatpush1.msra.mxu0 0.0
        %981 = vmatprep.subr.mxu0 0.0
        %982 = vmatpush1.msra.mxu0 0.0
        %983 = vmatprep.subr.mxu0 0.0
        %984 = vmatpush1.msra.mxu0 0.0
        %985 = vmatprep.subr.mxu0 0.0
        %986 = vmatpush1.msra.mxu0 0.0
        %987 = vmatprep.subr.mxu0 0.0
        %988 = vmatpush1.msra.mxu0 0.0
        %989 = vmatprep.subr.mxu0 0.0
        %990 = vmatpush1.msra.mxu0 0.0
        %991 = vmatprep.subr.mxu0 0.0
        %992 = vmatpush1.msra.mxu0 0.0
        %993 = vmatprep.subr.mxu0 0.0
        %994 = vmatpush1.msra.mxu0 0.0
        %995 = vmatprep.subr.mxu0 0.0
        %996 = vmatpush1.msra.mxu0 0.0
        %997 = vmatprep.subr.mxu0 0.0
        %998 = vmatpush1.msra.mxu0 0.0
        %999 = vmatprep.subr.mxu0 0.0
        %1000 = vmatpush1.msra.mxu0 0.0
        %1001 = vmatprep.subr.mxu0 0.0
        %1002 = vmatpush1.msra.mxu0 0.0
        %1003 = vmatprep.subr.mxu0 0.0
        %1004 = vmatpush1.msra.mxu0 0.0
        %1005 = vmatprep.subr.mxu0 0.0
        %1006 = vmatpush1.msra.mxu0 0.0
        %1007 = vmatprep.mubr.f32.mxu0 0.0
        %1008 = vmatmul.mubr.f32.gmra.mrb[0].mxu0 %v840
        %v1009 = vpop.f32.mrb[0].mxu0
        %v1010 = vadd.f32 %v827, %v1009
        %v1011 = vpop.f32.mrb[0].mxu0
        %v1012 = vadd.f32 %v827, %v1011
        %1013 = vmatprep.mubr.f32.mxu0 0.0
        %1014 = vmatmul.mubr.f32.gmra.mrb[0].mxu0 %v843
        %v1015 = vpop.f32.mrb[0].mxu0
        %v1016 = vadd.f32 %v832, %v1015
        %v1017 = vpop.f32.mrb[0].mxu0
        %v1018 = vadd.f32 %v832, %v1017
        %1019 = vmatprep.mubr.f32.mxu0 0.0
        %1020 = vmatmul.mubr.f32.gmra.mrb[0].mxu0 %v846
        %v1021 = vpop.f32.mrb[0].mxu0
        %v1022 = vadd.f32 %v837, %v1021
        %v1023 = vpop.f32.mrb[0].mxu0
        %v1024 = vadd.f32 %v837, %v1023
        %1025 = vdwg.mxu0
        %v1026 = vtanh.pop %v927
        %v1027 = vtanh.pop %v929
        %v1028 = vtanh.pop %v1010
        %v1029 = vtanh.pop %v1012
        %v1030 = vtanh.pop %v933
        %v1031 = vtanh.pop %v935
        %v1032 = vtanh.pop %v1016
        %v1033 = vtanh.pop %v1018
        %v1034 = vtanh.pop %v939
        %v1035 = vtanh.pop %v941
        %v1036 = vtanh.pop %v1022
        %v1037 = vtanh.pop %v1024
        %s1038 = scalar_lea.vmem %s3, 72
        %v1039 = vld [vmem:[%s1038] sm:$0xff]
        %v1040 = vld [vmem:[%s1038 + $0x8] sm:$0xff]
        %v1041 = vld [vmem:[%s1038 + $0x10] sm:$0xf]
        %s1042 = scalar_lea.vmem %s4, 72
        %v1043 = vld [vmem:[%s1042] sm:$0xff]
        %v1044 = vld [vmem:[%s1042 + $0x8] sm:$0xff]
        %v1045 = vld [vmem:[%s1042 + $0x10] sm:$0xf]
        %1047 = vset.pattern.permute.xlu0 0
        %1048 = vperm.xlu0 %1047, %v1043
        %v1049 = vpop.permute.xlu0 %1048
        %1052 = vset.pattern.permute.xlu0 0
        %1053 = vperm.xlu0 %1052, %v1044
        %v1054 = vpop.permute.xlu0 %1053
        %1057 = vset.pattern.permute.xlu0 0
        %1058 = vperm.xlu0 %1057, %v1045
        %v1059 = vpop.permute.xlu0 %1058
        %v1062 = vsel %vm393, %v1039, 0
        %v1065 = vsel %vm393, %v1040, 0
        %v1068 = vsel %vm393, %v1041, 0
        %v1071 = vsel %vm403, %v1034, 0
        %v1074 = vsel %vm403, %v1035, 0
        %v1077 = vsel %vm403, %v1036, 0
        %v1080 = vsel %vm403, %v1037, 0
        %1082 = vmatprep.subr.mxu0 %v1027
        %1083 = vmatpush1.msra.mxu0 %v1026
        %1084 = vmatprep.subr.mxu0 %v1031
        %1085 = vmatpush1.msra.mxu0 %v1030
        %1086 = vmatprep.subr.mxu0 %v1074
        %1087 = vmatpush1.msra.mxu0 %v1071
        %1088 = vmatprep.subr.mxu0 0.0
        %1089 = vmatpush1.msra.mxu0 0.0
        %1090 = vmatprep.subr.mxu0 0.0
        %1091 = vmatpush1.msra.mxu0 0.0
        %1092 = vmatprep.subr.mxu0 0.0
        %1093 = vmatpush1.msra.mxu0 0.0
        %1094 = vmatprep.subr.mxu0 0.0
        %1095 = vmatpush1.msra.mxu0 0.0
        %1096 = vmatprep.subr.mxu0 0.0
        %1097 = vmatpush1.msra.mxu0 0.0
        %1098 = vmatprep.subr.mxu0 0.0
        %1099 = vmatpush1.msra.mxu0 0.0
        %1100 = vmatprep.subr.mxu0 0.0
        %1101 = vmatpush1.msra.mxu0 0.0
        %1102 = vmatprep.subr.mxu0 0.0
        %1103 = vmatpush1.msra.mxu0 0.0
        %1104 = vmatprep.subr.mxu0 0.0
        %1105 = vmatpush1.msra.mxu0 0.0
        %1106 = vmatprep.subr.mxu0 0.0
        %1107 = vmatpush1.msra.mxu0 0.0
        %1108 = vmatprep.subr.mxu0 0.0
        %1109 = vmatpush1.msra.mxu0 0.0
        %1110 = vmatprep.subr.mxu0 0.0
        %1111 = vmatpush1.msra.mxu0 0.0
        %1112 = vmatprep.subr.mxu0 0.0
        %1113 = vmatpush1.msra.mxu0 0.0
        %1114 = vmatprep.subr.mxu0 0.0
        %1115 = vmatpush1.msra.mxu0 0.0
        %1116 = vmatprep.subr.mxu0 0.0
        %1117 = vmatpush1.msra.mxu0 0.0
        %1118 = vmatprep.subr.mxu0 0.0
        %1119 = vmatpush1.msra.mxu0 0.0
        %1120 = vmatprep.subr.mxu0 0.0
        %1121 = vmatpush1.msra.mxu0 0.0
        %1122 = vmatprep.subr.mxu0 0.0
        %1123 = vmatpush1.msra.mxu0 0.0
        %1124 = vmatprep.subr.mxu0 0.0
        %1125 = vmatpush1.msra.mxu0 0.0
        %1126 = vmatprep.subr.mxu0 0.0
        %1127 = vmatpush1.msra.mxu0 0.0
        %1128 = vmatprep.subr.mxu0 0.0
        %1129 = vmatpush1.msra.mxu0 0.0
        %1130 = vmatprep.subr.mxu0 0.0
        %1131 = vmatpush1.msra.mxu0 0.0
        %1132 = vmatprep.subr.mxu0 0.0
        %1133 = vmatpush1.msra.mxu0 0.0
        %1134 = vmatprep.subr.mxu0 0.0
        %1135 = vmatpush1.msra.mxu0 0.0
        %1136 = vmatprep.subr.mxu0 0.0
        %1137 = vmatpush1.msra.mxu0 0.0
        %1138 = vmatprep.subr.mxu0 0.0
        %1139 = vmatpush1.msra.mxu0 0.0
        %1140 = vmatprep.subr.mxu0 0.0
        %1141 = vmatpush1.msra.mxu0 0.0
        %1142 = vmatprep.subr.mxu0 0.0
        %1143 = vmatpush1.msra.mxu0 0.0
        %1144 = vmatprep.subr.mxu0 0.0
        %1145 = vmatpush1.msra.mxu0 0.0
        %1146 = vmatprep.mubr.f32.mxu0 0.0
        %1147 = vmatmul.mubr.f32.gmra.mrb[0].mxu0 %v1062
        %v1148 = vpop.f32.mrb[0].mxu0
        %v1149 = vadd.f32 %v1049, %v1148
        %v1150 = vpop.f32.mrb[0].mxu0
        %v1151 = vadd.f32 %v1049, %v1150
        %1152 = vmatprep.mubr.f32.mxu0 0.0
        %1153 = vmatmul.mubr.f32.gmra.mrb[0].mxu0 %v1065
        %v1154 = vpop.f32.mrb[0].mxu0
        %v1155 = vadd.f32 %v1054, %v1154
        %v1156 = vpop.f32.mrb[0].mxu0
        %v1157 = vadd.f32 %v1054, %v1156
        %1158 = vmatprep.mubr.f32.mxu0 0.0
        %1159 = vmatmul.mubr.f32.gmra.mrb[0].mxu0 %v1068
        %v1160 = vpop.f32.mrb[0].mxu0
        %v1161 = vadd.f32 %v1059, %v1160
        %v1162 = vpop.f32.mrb[0].mxu0
        %v1163 = vadd.f32 %v1059, %v1162
        %1164 = vdwg.mxu0
        %1165 = vmatprep.subr.mxu0 %v1029
        %1166 = vmatpush1.msra.mxu0 %v1028
        %1167 = vmatprep.subr.mxu0 %v1033
        %1168 = vmatpush1.msra.mxu0 %v1032
        %1169 = vmatprep.subr.mxu0 %v1080
        %1170 = vmatpush1.msra.mxu0 %v1077
        %1171 = vmatprep.subr.mxu0 0.0
        %1172 = vmatpush1.msra.mxu0 0.0
        %1173 = vmatprep.subr.mxu0 0.0
        %1174 = vmatpush1.msra.mxu0 0.0
        %1175 = vmatprep.subr.mxu0 0.0
        %1176 = vmatpush1.msra.mxu0 0.0
        %1177 = vmatprep.subr.mxu0 0.0
        %1178 = vmatpush1.msra.mxu0 0.0
        %1179 = vmatprep.subr.mxu0 0.0
        %1180 = vmatpush1.msra.mxu0 0.0
        %1181 = vmatprep.subr.mxu0 0.0
        %1182 = vmatpush1.msra.mxu0 0.0
        %1183 = vmatprep.subr.mxu0 0.0
        %1184 = vmatpush1.msra.mxu0 0.0
        %1185 = vmatprep.subr.mxu0 0.0
        %1186 = vmatpush1.msra.mxu0 0.0
        %1187 = vmatprep.subr.mxu0 0.0
        %1188 = vmatpush1.msra.mxu0 0.0
        %1189 = vmatprep.subr.mxu0 0.0
        %1190 = vmatpush1.msra.mxu0 0.0
        %1191 = vmatprep.subr.mxu0 0.0
        %1192 = vmatpush1.msra.mxu0 0.0
        %1193 = vmatprep.subr.mxu0 0.0
        %1194 = vmatpush1.msra.mxu0 0.0
        %1195 = vmatprep.subr.mxu0 0.0
        %1196 = vmatpush1.msra.mxu0 0.0
        %1197 = vmatprep.subr.mxu0 0.0
        %1198 = vmatpush1.msra.mxu0 0.0
        %1199 = vmatprep.subr.mxu0 0.0
        %1200 = vmatpush1.msra.mxu0 0.0
        %1201 = vmatprep.subr.mxu0 0.0
        %1202 = vmatpush1.msra.mxu0 0.0
        %1203 = vmatprep.subr.mxu0 0.0
        %1204 = vmatpush1.msra.mxu0 0.0
        %1205 = vmatprep.subr.mxu0 0.0
        %1206 = vmatpush1.msra.mxu0 0.0
        %1207 = vmatprep.subr.mxu0 0.0
        %1208 = vmatpush1.msra.mxu0 0.0
        %1209 = vmatprep.subr.mxu0 0.0
        %1210 = vmatpush1.msra.mxu0 0.0
        %1211 = vmatprep.subr.mxu0 0.0
        %1212 = vmatpush1.msra.mxu0 0.0
        %1213 = vmatprep.subr.mxu0 0.0
        %1214 = vmatpush1.msra.mxu0 0.0
        %1215 = vmatprep.subr.mxu0 0.0
        %1216 = vmatpush1.msra.mxu0 0.0
        %1217 = vmatprep.subr.mxu0 0.0
        %1218 = vmatpush1.msra.mxu0 0.0
        %1219 = vmatprep.subr.mxu0 0.0
        %1220 = vmatpush1.msra.mxu0 0.0
        %1221 = vmatprep.subr.mxu0 0.0
        %1222 = vmatpush1.msra.mxu0 0.0
        %1223 = vmatprep.subr.mxu0 0.0
        %1224 = vmatpush1.msra.mxu0 0.0
        %1225 = vmatprep.subr.mxu0 0.0
        %1226 = vmatpush1.msra.mxu0 0.0
        %1227 = vmatprep.subr.mxu0 0.0
        %1228 = vmatpush1.msra.mxu0 0.0
        %1229 = vmatprep.mubr.f32.mxu0 0.0
        %1230 = vmatmul.mubr.f32.gmra.mrb[0].mxu0 %v1062
        %v1231 = vpop.f32.mrb[0].mxu0
        %v1232 = vadd.f32 %v1049, %v1231
        %v1233 = vpop.f32.mrb[0].mxu0
        %v1234 = vadd.f32 %v1049, %v1233
        %1235 = vmatprep.mubr.f32.mxu0 0.0
        %1236 = vmatmul.mubr.f32.gmra.mrb[0].mxu0 %v1065
        %v1237 = vpop.f32.mrb[0].mxu0
        %v1238 = vadd.f32 %v1054, %v1237
        %v1239 = vpop.f32.mrb[0].mxu0
        %v1240 = vadd.f32 %v1054, %v1239
        %1241 = vmatprep.mubr.f32.mxu0 0.0
        %1242 = vmatmul.mubr.f32.gmra.mrb[0].mxu0 %v1068
        %v1243 = vpop.f32.mrb[0].mxu0
        %v1244 = vadd.f32 %v1059, %v1243
        %v1245 = vpop.f32.mrb[0].mxu0
        %v1246 = vadd.f32 %v1059, %v1245
        %1247 = vdwg.mxu0
        %v1248 = vtanh.pop %v1149
        %v1249 = vtanh.pop %v1151
        %v1250 = vtanh.pop %v1232
        %v1251 = vtanh.pop %v1234
        %v1252 = vtanh.pop %v1155
        %v1253 = vtanh.pop %v1157
        %v1254 = vtanh.pop %v1238
        %v1255 = vtanh.pop %v1240
        %v1256 = vtanh.pop %v1161
        %v1257 = vtanh.pop %v1163
        %v1258 = vtanh.pop %v1244
        %v1259 = vtanh.pop %v1246
        %s1260 = scalar_lea.vmem %s3, 96
        %v1261 = vld [vmem:[%s1260] sm:$0xff]
        %v1262 = vld [vmem:[%s1260 + $0x8] sm:$0xff]
        %v1263 = vld [vmem:[%s1260 + $0x10] sm:$0xf]
        %s1264 = scalar_lea.vmem %s4, 96
        %v1265 = vld [vmem:[%s1264] sm:$0xff]
        %v1266 = vld [vmem:[%s1264 + $0x8] sm:$0xff]
        %v1267 = vld [vmem:[%s1264 + $0x10] sm:$0xf]
        %1269 = vset.pattern.permute.xlu0 0
        %1270 = vperm.xlu0 %1269, %v1265
        %v1271 = vpop.permute.xlu0 %1270
        %1274 = vset.pattern.permute.xlu0 0
        %1275 = vperm.xlu0 %1274, %v1266
        %v1276 = vpop.permute.xlu0 %1275
        %1279 = vset.pattern.permute.xlu0 0
        %1280 = vperm.xlu0 %1279, %v1267
        %v1281 = vpop.permute.xlu0 %1280
        %v1284 = vsel %vm393, %v1261, 0
        %v1287 = vsel %vm393, %v1262, 0
        %v1290 = vsel %vm393, %v1263, 0
        %v1293 = vsel %vm403, %v1256, 0
        %v1296 = vsel %vm403, %v1257, 0
        %v1299 = vsel %vm403, %v1258, 0
        %v1302 = vsel %vm403, %v1259, 0
        %1304 = vmatprep.subr.mxu0 %v1249
        %1305 = vmatpush1.msra.mxu0 %v1248
        %1306 = vmatprep.subr.mxu0 %v1253
        %1307 = vmatpush1.msra.mxu0 %v1252
        %1308 = vmatprep.subr.mxu0 %v1296
        %1309 = vmatpush1.msra.mxu0 %v1293
        %1310 = vmatprep.subr.mxu0 0.0
        %1311 = vmatpush1.msra.mxu0 0.0
        %1312 = vmatprep.subr.mxu0 0.0
        %1313 = vmatpush1.msra.mxu0 0.0
        %1314 = vmatprep.subr.mxu0 0.0
        %1315 = vmatpush1.msra.mxu0 0.0
        %1316 = vmatprep.subr.mxu0 0.0
        %1317 = vmatpush1.msra.mxu0 0.0
        %1318 = vmatprep.subr.mxu0 0.0
        %1319 = vmatpush1.msra.mxu0 0.0
        %1320 = vmatprep.subr.mxu0 0.0
        %1321 = vmatpush1.msra.mxu0 0.0
        %1322 = vmatprep.subr.mxu0 0.0
        %1323 = vmatpush1.msra.mxu0 0.0
        %1324 = vmatprep.subr.mxu0 0.0
        %1325 = vmatpush1.msra.mxu0 0.0
        %1326 = vmatprep.subr.mxu0 0.0
        %1327 = vmatpush1.msra.mxu0 0.0
        %1328 = vmatprep.subr.mxu0 0.0
        %1329 = vmatpush1.msra.mxu0 0.0
        %1330 = vmatprep.subr.mxu0 0.0
        %1331 = vmatpush1.msra.mxu0 0.0
        %1332 = vmatprep.subr.mxu0 0.0
        %1333 = vmatpush1.msra.mxu0 0.0
        %1334 = vmatprep.subr.mxu0 0.0
        %1335 = vmatpush1.msra.mxu0 0.0
        %1336 = vmatprep.subr.mxu0 0.0
        %1337 = vmatpush1.msra.mxu0 0.0
        %1338 = vmatprep.subr.mxu0 0.0
        %1339 = vmatpush1.msra.mxu0 0.0
        %1340 = vmatprep.subr.mxu0 0.0
        %1341 = vmatpush1.msra.mxu0 0.0
        %1342 = vmatprep.subr.mxu0 0.0
        %1343 = vmatpush1.msra.mxu0 0.0
        %1344 = vmatprep.subr.mxu0 0.0
        %1345 = vmatpush1.msra.mxu0 0.0
        %1346 = vmatprep.subr.mxu0 0.0
        %1347 = vmatpush1.msra.mxu0 0.0
        %1348 = vmatprep.subr.mxu0 0.0
        %1349 = vmatpush1.msra.mxu0 0.0
        %1350 = vmatprep.subr.mxu0 0.0
        %1351 = vmatpush1.msra.mxu0 0.0
        %1352 = vmatprep.subr.mxu0 0.0
        %1353 = vmatpush1.msra.mxu0 0.0
        %1354 = vmatprep.subr.mxu0 0.0
        %1355 = vmatpush1.msra.mxu0 0.0
        %1356 = vmatprep.subr.mxu0 0.0
        %1357 = vmatpush1.msra.mxu0 0.0
        %1358 = vmatprep.subr.mxu0 0.0
        %1359 = vmatpush1.msra.mxu0 0.0
        %1360 = vmatprep.subr.mxu0 0.0
        %1361 = vmatpush1.msra.mxu0 0.0
        %1362 = vmatprep.subr.mxu0 0.0
        %1363 = vmatpush1.msra.mxu0 0.0
        %1364 = vmatprep.subr.mxu0 0.0
        %1365 = vmatpush1.msra.mxu0 0.0
        %1366 = vmatprep.subr.mxu0 0.0
        %1367 = vmatpush1.msra.mxu0 0.0
        %1368 = vmatprep.mubr.f32.mxu0 0.0
        %1369 = vmatmul.mubr.f32.gmra.mrb[0].mxu0 %v1284
        %v1370 = vpop.f32.mrb[0].mxu0
        %v1371 = vadd.f32 %v1271, %v1370
        %v1372 = vpop.f32.mrb[0].mxu0
        %v1373 = vadd.f32 %v1271, %v1372
        %1374 = vmatprep.mubr.f32.mxu0 0.0
        %1375 = vmatmul.mubr.f32.gmra.mrb[0].mxu0 %v1287
        %v1376 = vpop.f32.mrb[0].mxu0
        %v1377 = vadd.f32 %v1276, %v1376
        %v1378 = vpop.f32.mrb[0].mxu0
        %v1379 = vadd.f32 %v1276, %v1378
        %1380 = vmatprep.mubr.f32.mxu0 0.0
        %1381 = vmatmul.mubr.f32.gmra.mrb[0].mxu0 %v1290
        %v1382 = vpop.f32.mrb[0].mxu0
        %v1383 = vadd.f32 %v1281, %v1382
        %v1384 = vpop.f32.mrb[0].mxu0
        %v1385 = vadd.f32 %v1281, %v1384
        %1386 = vdwg.mxu0
        %1387 = vmatprep.subr.mxu0 %v1251
        %1388 = vmatpush1.msra.mxu0 %v1250
        %1389 = vmatprep.subr.mxu0 %v1255
        %1390 = vmatpush1.msra.mxu0 %v1254
        %1391 = vmatprep.subr.mxu0 %v1302
        %1392 = vmatpush1.msra.mxu0 %v1299
        %1393 = vmatprep.subr.mxu0 0.0
        %1394 = vmatpush1.msra.mxu0 0.0
        %1395 = vmatprep.subr.mxu0 0.0
        %1396 = vmatpush1.msra.mxu0 0.0
        %1397 = vmatprep.subr.mxu0 0.0
        %1398 = vmatpush1.msra.mxu0 0.0
        %1399 = vmatprep.subr.mxu0 0.0
        %1400 = vmatpush1.msra.mxu0 0.0
        %1401 = vmatprep.subr.mxu0 0.0
        %1402 = vmatpush1.msra.mxu0 0.0
        %1403 = vmatprep.subr.mxu0 0.0
        %1404 = vmatpush1.msra.mxu0 0.0
        %1405 = vmatprep.subr.mxu0 0.0
        %1406 = vmatpush1.msra.mxu0 0.0
        %1407 = vmatprep.subr.mxu0 0.0
        %1408 = vmatpush1.msra.mxu0 0.0
        %1409 = vmatprep.subr.mxu0 0.0
        %1410 = vmatpush1.msra.mxu0 0.0
        %1411 = vmatprep.subr.mxu0 0.0
        %1412 = vmatpush1.msra.mxu0 0.0
        %1413 = vmatprep.subr.mxu0 0.0
        %1414 = vmatpush1.msra.mxu0 0.0
        %1415 = vmatprep.subr.mxu0 0.0
        %1416 = vmatpush1.msra.mxu0 0.0
        %1417 = vmatprep.subr.mxu0 0.0
        %1418 = vmatpush1.msra.mxu0 0.0
        %1419 = vmatprep.subr.mxu0 0.0
        %1420 = vmatpush1.msra.mxu0 0.0
        %1421 = vmatprep.subr.mxu0 0.0
        %1422 = vmatpush1.msra.mxu0 0.0
        %1423 = vmatprep.subr.mxu0 0.0
        %1424 = vmatpush1.msra.mxu0 0.0
        %1425 = vmatprep.subr.mxu0 0.0
        %1426 = vmatpush1.msra.mxu0 0.0
        %1427 = vmatprep.subr.mxu0 0.0
        %1428 = vmatpush1.msra.mxu0 0.0
        %1429 = vmatprep.subr.mxu0 0.0
        %1430 = vmatpush1.msra.mxu0 0.0
        %1431 = vmatprep.subr.mxu0 0.0
        %1432 = vmatpush1.msra.mxu0 0.0
        %1433 = vmatprep.subr.mxu0 0.0
        %1434 = vmatpush1.msra.mxu0 0.0
        %1435 = vmatprep.subr.mxu0 0.0
        %1436 = vmatpush1.msra.mxu0 0.0
        %1437 = vmatprep.subr.mxu0 0.0
        %1438 = vmatpush1.msra.mxu0 0.0
        %1439 = vmatprep.subr.mxu0 0.0
        %1440 = vmatpush1.msra.mxu0 0.0
        %1441 = vmatprep.subr.mxu0 0.0
        %1442 = vmatpush1.msra.mxu0 0.0
        %1443 = vmatprep.subr.mxu0 0.0
        %1444 = vmatpush1.msra.mxu0 0.0
        %1445 = vmatprep.subr.mxu0 0.0
        %1446 = vmatpush1.msra.mxu0 0.0
        %1447 = vmatprep.subr.mxu0 0.0
        %1448 = vmatpush1.msra.mxu0 0.0
        %1449 = vmatprep.subr.mxu0 0.0
        %1450 = vmatpush1.msra.mxu0 0.0
        %1451 = vmatprep.mubr.f32.mxu0 0.0
        %1452 = vmatmul.mubr.f32.gmra.mrb[0].mxu0 %v1284
        %v1453 = vpop.f32.mrb[0].mxu0
        %v1454 = vadd.f32 %v1271, %v1453
        %v1455 = vpop.f32.mrb[0].mxu0
        %v1456 = vadd.f32 %v1271, %v1455
        %1457 = vmatprep.mubr.f32.mxu0 0.0
        %1458 = vmatmul.mubr.f32.gmra.mrb[0].mxu0 %v1287
        %v1459 = vpop.f32.mrb[0].mxu0
        %v1460 = vadd.f32 %v1276, %v1459
        %v1461 = vpop.f32.mrb[0].mxu0
        %v1462 = vadd.f32 %v1276, %v1461
        %1463 = vmatprep.mubr.f32.mxu0 0.0
        %1464 = vmatmul.mubr.f32.gmra.mrb[0].mxu0 %v1290
        %v1465 = vpop.f32.mrb[0].mxu0
        %v1466 = vadd.f32 %v1281, %v1465
        %v1467 = vpop.f32.mrb[0].mxu0
        %v1468 = vadd.f32 %v1281, %v1467
        %1469 = vdwg.mxu0
        %v1470 = vtanh.pop %v1371
        %v1471 = vtanh.pop %v1373
        %v1472 = vtanh.pop %v1454
        %v1473 = vtanh.pop %v1456
        %v1474 = vtanh.pop %v1377
        %v1475 = vtanh.pop %v1379
        %v1476 = vtanh.pop %v1460
        %v1477 = vtanh.pop %v1462
        %v1478 = vtanh.pop %v1383
        %v1479 = vtanh.pop %v1385
        %v1480 = vtanh.pop %v1466
        %v1481 = vtanh.pop %v1468
        %s1482 = scalar_lea.vmem %s3, 120
        %v1483 = vld [vmem:[%s1482] sm:$0xff]
        %v1484 = vld [vmem:[%s1482 + $0x8] sm:$0xff]
        %v1485 = vld [vmem:[%s1482 + $0x10] sm:$0xf]
        %s1486 = scalar_lea.vmem %s4, 120
        %v1487 = vld [vmem:[%s1486] sm:$0xff]
        %v1488 = vld [vmem:[%s1486 + $0x8] sm:$0xff]
        %v1489 = vld [vmem:[%s1486 + $0x10] sm:$0xf]
        %1491 = vset.pattern.permute.xlu0 0
        %1492 = vperm.xlu0 %1491, %v1487
        %v1493 = vpop.permute.xlu0 %1492
        %1496 = vset.pattern.permute.xlu0 0
        %1497 = vperm.xlu0 %1496, %v1488
        %v1498 = vpop.permute.xlu0 %1497
        %1501 = vset.pattern.permute.xlu0 0
        %1502 = vperm.xlu0 %1501, %v1489
        %v1503 = vpop.permute.xlu0 %1502
        %v1506 = vsel %vm393, %v1483, 0
        %v1509 = vsel %vm393, %v1484, 0
        %v1512 = vsel %vm393, %v1485, 0
        %v1515 = vsel %vm403, %v1478, 0
        %v1518 = vsel %vm403, %v1479, 0
        %v1521 = vsel %vm403, %v1480, 0
        %v1524 = vsel %vm403, %v1481, 0
        %1526 = vmatprep.subr.mxu0 %v1471
        %1527 = vmatpush1.msra.mxu0 %v1470
        %1528 = vmatprep.subr.mxu0 %v1475
        %1529 = vmatpush1.msra.mxu0 %v1474
        %1530 = vmatprep.subr.mxu0 %v1518
        %1531 = vmatpush1.msra.mxu0 %v1515
        %1532 = vmatprep.subr.mxu0 0.0
        %1533 = vmatpush1.msra.mxu0 0.0
        %1534 = vmatprep.subr.mxu0 0.0
        %1535 = vmatpush1.msra.mxu0 0.0
        %1536 = vmatprep.subr.mxu0 0.0
        %1537 = vmatpush1.msra.mxu0 0.0
        %1538 = vmatprep.subr.mxu0 0.0
        %1539 = vmatpush1.msra.mxu0 0.0
        %1540 = vmatprep.subr.mxu0 0.0
        %1541 = vmatpush1.msra.mxu0 0.0
        %1542 = vmatprep.subr.mxu0 0.0
        %1543 = vmatpush1.msra.mxu0 0.0
        %1544 = vmatprep.subr.mxu0 0.0
        %1545 = vmatpush1.msra.mxu0 0.0
        %1546 = vmatprep.subr.mxu0 0.0
        %1547 = vmatpush1.msra.mxu0 0.0
        %1548 = vmatprep.subr.mxu0 0.0
        %1549 = vmatpush1.msra.mxu0 0.0
        %1550 = vmatprep.subr.mxu0 0.0
        %1551 = vmatpush1.msra.mxu0 0.0
        %1552 = vmatprep.subr.mxu0 0.0
        %1553 = vmatpush1.msra.mxu0 0.0
        %1554 = vmatprep.subr.mxu0 0.0
        %1555 = vmatpush1.msra.mxu0 0.0
        %1556 = vmatprep.subr.mxu0 0.0
        %1557 = vmatpush1.msra.mxu0 0.0
        %1558 = vmatprep.subr.mxu0 0.0
        %1559 = vmatpush1.msra.mxu0 0.0
        %1560 = vmatprep.subr.mxu0 0.0
        %1561 = vmatpush1.msra.mxu0 0.0
        %1562 = vmatprep.subr.mxu0 0.0
        %1563 = vmatpush1.msra.mxu0 0.0
        %1564 = vmatprep.subr.mxu0 0.0
        %1565 = vmatpush1.msra.mxu0 0.0
        %1566 = vmatprep.subr.mxu0 0.0
        %1567 = vmatpush1.msra.mxu0 0.0
        %1568 = vmatprep.subr.mxu0 0.0
        %1569 = vmatpush1.msra.mxu0 0.0
        %1570 = vmatprep.subr.mxu0 0.0
        %1571 = vmatpush1.msra.mxu0 0.0
        %1572 = vmatprep.subr.mxu0 0.0
        %1573 = vmatpush1.msra.mxu0 0.0
        %1574 = vmatprep.subr.mxu0 0.0
        %1575 = vmatpush1.msra.mxu0 0.0
        %1576 = vmatprep.subr.mxu0 0.0
        %1577 = vmatpush1.msra.mxu0 0.0
        %1578 = vmatprep.subr.mxu0 0.0
        %1579 = vmatpush1.msra.mxu0 0.0
        %1580 = vmatprep.subr.mxu0 0.0
        %1581 = vmatpush1.msra.mxu0 0.0
        %1582 = vmatprep.subr.mxu0 0.0
        %1583 = vmatpush1.msra.mxu0 0.0
        %1584 = vmatprep.subr.mxu0 0.0
        %1585 = vmatpush1.msra.mxu0 0.0
        %1586 = vmatprep.subr.mxu0 0.0
        %1587 = vmatpush1.msra.mxu0 0.0
        %1588 = vmatprep.subr.mxu0 0.0
        %1589 = vmatpush1.msra.mxu0 0.0
        %1590 = vmatprep.mubr.f32.mxu0 0.0
        %1591 = vmatmul.mubr.f32.gmra.mrb[0].mxu0 %v1506
        %v1592 = vpop.f32.mrb[0].mxu0
        %v1593 = vadd.f32 %v1493, %v1592
        %v1594 = vpop.f32.mrb[0].mxu0
        %v1595 = vadd.f32 %v1493, %v1594
        %1596 = vmatprep.mubr.f32.mxu0 0.0
        %1597 = vmatmul.mubr.f32.gmra.mrb[0].mxu0 %v1509
        %v1598 = vpop.f32.mrb[0].mxu0
        %v1599 = vadd.f32 %v1498, %v1598
        %v1600 = vpop.f32.mrb[0].mxu0
        %v1601 = vadd.f32 %v1498, %v1600
        %1602 = vmatprep.mubr.f32.mxu0 0.0
        %1603 = vmatmul.mubr.f32.gmra.mrb[0].mxu0 %v1512
        %v1604 = vpop.f32.mrb[0].mxu0
        %v1605 = vadd.f32 %v1503, %v1604
        %v1606 = vpop.f32.mrb[0].mxu0
        %v1607 = vadd.f32 %v1503, %v1606
        %1608 = vdwg.mxu0
        %1609 = vmatprep.subr.mxu0 %v1473
        %1610 = vmatpush1.msra.mxu0 %v1472
        %1611 = vmatprep.subr.mxu0 %v1477
        %1612 = vmatpush1.msra.mxu0 %v1476
        %1613 = vmatprep.subr.mxu0 %v1524
        %1614 = vmatpush1.msra.mxu0 %v1521
        %1615 = vmatprep.subr.mxu0 0.0
        %1616 = vmatpush1.msra.mxu0 0.0
        %1617 = vmatprep.subr.mxu0 0.0
        %1618 = vmatpush1.msra.mxu0 0.0
        %1619 = vmatprep.subr.mxu0 0.0
        %1620 = vmatpush1.msra.mxu0 0.0
        %1621 = vmatprep.subr.mxu0 0.0
        %1622 = vmatpush1.msra.mxu0 0.0
        %1623 = vmatprep.subr.mxu0 0.0
        %1624 = vmatpush1.msra.mxu0 0.0
        %1625 = vmatprep.subr.mxu0 0.0
        %1626 = vmatpush1.msra.mxu0 0.0
        %1627 = vmatprep.subr.mxu0 0.0
        %1628 = vmatpush1.msra.mxu0 0.0
        %1629 = vmatprep.subr.mxu0 0.0
        %1630 = vmatpush1.msra.mxu0 0.0
        %1631 = vmatprep.subr.mxu0 0.0
        %1632 = vmatpush1.msra.mxu0 0.0
        %1633 = vmatprep.subr.mxu0 0.0
        %1634 = vmatpush1.msra.mxu0 0.0
        %1635 = vmatprep.subr.mxu0 0.0
        %1636 = vmatpush1.msra.mxu0 0.0
        %1637 = vmatprep.subr.mxu0 0.0
        %1638 = vmatpush1.msra.mxu0 0.0
        %1639 = vmatprep.subr.mxu0 0.0
        %1640 = vmatpush1.msra.mxu0 0.0
        %1641 = vmatprep.subr.mxu0 0.0
        %1642 = vmatpush1.msra.mxu0 0.0
        %1643 = vmatprep.subr.mxu0 0.0
        %1644 = vmatpush1.msra.mxu0 0.0
        %1645 = vmatprep.subr.mxu0 0.0
        %1646 = vmatpush1.msra.mxu0 0.0
        %1647 = vmatprep.subr.mxu0 0.0
        %1648 = vmatpush1.msra.mxu0 0.0
        %1649 = vmatprep.subr.mxu0 0.0
        %1650 = vmatpush1.msra.mxu0 0.0
        %1651 = vmatprep.subr.mxu0 0.0
        %1652 = vmatpush1.msra.mxu0 0.0
        %1653 = vmatprep.subr.mxu0 0.0
        %1654 = vmatpush1.msra.mxu0 0.0
        %1655 = vmatprep.subr.mxu0 0.0
        %1656 = vmatpush1.msra.mxu0 0.0
        %1657 = vmatprep.subr.mxu0 0.0
        %1658 = vmatpush1.msra.mxu0 0.0
        %1659 = vmatprep.subr.mxu0 0.0
        %1660 = vmatpush1.msra.mxu0 0.0
        %1661 = vmatprep.subr.mxu0 0.0
        %1662 = vmatpush1.msra.mxu0 0.0
        %1663 = vmatprep.subr.mxu0 0.0
        %1664 = vmatpush1.msra.mxu0 0.0
        %1665 = vmatprep.subr.mxu0 0.0
        %1666 = vmatpush1.msra.mxu0 0.0
        %1667 = vmatprep.subr.mxu0 0.0
        %1668 = vmatpush1.msra.mxu0 0.0
        %1669 = vmatprep.subr.mxu0 0.0
        %1670 = vmatpush1.msra.mxu0 0.0
        %1671 = vmatprep.subr.mxu0 0.0
        %1672 = vmatpush1.msra.mxu0 0.0
        %1673 = vmatprep.mubr.f32.mxu0 0.0
        %1674 = vmatmul.mubr.f32.gmra.mrb[0].mxu0 %v1506
        %v1675 = vpop.f32.mrb[0].mxu0
        %v1676 = vadd.f32 %v1493, %v1675
        %v1677 = vpop.f32.mrb[0].mxu0
        %v1678 = vadd.f32 %v1493, %v1677
        %1679 = vmatprep.mubr.f32.mxu0 0.0
        %1680 = vmatmul.mubr.f32.gmra.mrb[0].mxu0 %v1509
        %v1681 = vpop.f32.mrb[0].mxu0
        %v1682 = vadd.f32 %v1498, %v1681
        %v1683 = vpop.f32.mrb[0].mxu0
        %v1684 = vadd.f32 %v1498, %v1683
        %1685 = vmatprep.mubr.f32.mxu0 0.0
        %1686 = vmatmul.mubr.f32.gmra.mrb[0].mxu0 %v1512
        %v1687 = vpop.f32.mrb[0].mxu0
        %v1688 = vadd.f32 %v1503, %v1687
        %v1689 = vpop.f32.mrb[0].mxu0
        %v1690 = vadd.f32 %v1503, %v1689
        %1691 = vdwg.mxu0
        %v1692 = vtanh.pop %v1593
        %v1693 = vtanh.pop %v1595
        %v1694 = vtanh.pop %v1676
        %v1695 = vtanh.pop %v1678
        %v1696 = vtanh.pop %v1599
        %v1697 = vtanh.pop %v1601
        %v1698 = vtanh.pop %v1682
        %v1699 = vtanh.pop %v1684
        %v1700 = vtanh.pop %v1605
        %v1701 = vtanh.pop %v1607
        %v1702 = vtanh.pop %v1688
        %v1703 = vtanh.pop %v1690
        %s1704 = scalar_lea.vmem %s3, 144
        %v1705 = vld [vmem:[%s1704] sm:$0xff]
        %v1706 = vld [vmem:[%s1704 + $0x8] sm:$0xff]
        %v1707 = vld [vmem:[%s1704 + $0x10] sm:$0xf]
        %s1708 = scalar_lea.vmem %s4, 144
        %v1709 = vld [vmem:[%s1708] sm:$0xff]
        %v1710 = vld [vmem:[%s1708 + $0x8] sm:$0xff]
        %v1711 = vld [vmem:[%s1708 + $0x10] sm:$0xf]
        %1713 = vset.pattern.permute.xlu0 0
        %1714 = vperm.xlu0 %1713, %v1709
        %v1715 = vpop.permute.xlu0 %1714
        %1718 = vset.pattern.permute.xlu0 0
        %1719 = vperm.xlu0 %1718, %v1710
        %v1720 = vpop.permute.xlu0 %1719
        %1723 = vset.pattern.permute.xlu0 0
        %1724 = vperm.xlu0 %1723, %v1711
        %v1725 = vpop.permute.xlu0 %1724
        %v1728 = vsel %vm393, %v1705, 0
        %v1731 = vsel %vm393, %v1706, 0
        %v1734 = vsel %vm393, %v1707, 0
        %v1737 = vsel %vm403, %v1700, 0
        %v1740 = vsel %vm403, %v1701, 0
        %v1743 = vsel %vm403, %v1702, 0
        %v1746 = vsel %vm403, %v1703, 0
        %1748 = vmatprep.subr.mxu0 %v1693
        %1749 = vmatpush1.msra.mxu0 %v1692
        %1750 = vmatprep.subr.mxu0 %v1697
        %1751 = vmatpush1.msra.mxu0 %v1696
        %1752 = vmatprep.subr.mxu0 %v1740
        %1753 = vmatpush1.msra.mxu0 %v1737
        %1754 = vmatprep.subr.mxu0 0.0
        %1755 = vmatpush1.msra.mxu0 0.0
        %1756 = vmatprep.subr.mxu0 0.0
        %1757 = vmatpush1.msra.mxu0 0.0
        %1758 = vmatprep.subr.mxu0 0.0
        %1759 = vmatpush1.msra.mxu0 0.0
        %1760 = vmatprep.subr.mxu0 0.0
        %1761 = vmatpush1.msra.mxu0 0.0
        %1762 = vmatprep.subr.mxu0 0.0
        %1763 = vmatpush1.msra.mxu0 0.0
        %1764 = vmatprep.subr.mxu0 0.0
        %1765 = vmatpush1.msra.mxu0 0.0
        %1766 = vmatprep.subr.mxu0 0.0
        %1767 = vmatpush1.msra.mxu0 0.0
        %1768 = vmatprep.subr.mxu0 0.0
        %1769 = vmatpush1.msra.mxu0 0.0
        %1770 = vmatprep.subr.mxu0 0.0
        %1771 = vmatpush1.msra.mxu0 0.0
        %1772 = vmatprep.subr.mxu0 0.0
        %1773 = vmatpush1.msra.mxu0 0.0
        %1774 = vmatprep.subr.mxu0 0.0
        %1775 = vmatpush1.msra.mxu0 0.0
        %1776 = vmatprep.subr.mxu0 0.0
        %1777 = vmatpush1.msra.mxu0 0.0
        %1778 = vmatprep.subr.mxu0 0.0
        %1779 = vmatpush1.msra.mxu0 0.0
        %1780 = vmatprep.subr.mxu0 0.0
        %1781 = vmatpush1.msra.mxu0 0.0
        %1782 = vmatprep.subr.mxu0 0.0
        %1783 = vmatpush1.msra.mxu0 0.0
        %1784 = vmatprep.subr.mxu0 0.0
        %1785 = vmatpush1.msra.mxu0 0.0
        %1786 = vmatprep.subr.mxu0 0.0
        %1787 = vmatpush1.msra.mxu0 0.0
        %1788 = vmatprep.subr.mxu0 0.0
        %1789 = vmatpush1.msra.mxu0 0.0
        %1790 = vmatprep.subr.mxu0 0.0
        %1791 = vmatpush1.msra.mxu0 0.0
        %1792 = vmatprep.subr.mxu0 0.0
        %1793 = vmatpush1.msra.mxu0 0.0
        %1794 = vmatprep.subr.mxu0 0.0
        %1795 = vmatpush1.msra.mxu0 0.0
        %1796 = vmatprep.subr.mxu0 0.0
        %1797 = vmatpush1.msra.mxu0 0.0
        %1798 = vmatprep.subr.mxu0 0.0
        %1799 = vmatpush1.msra.mxu0 0.0
        %1800 = vmatprep.subr.mxu0 0.0
        %1801 = vmatpush1.msra.mxu0 0.0
        %1802 = vmatprep.subr.mxu0 0.0
        %1803 = vmatpush1.msra.mxu0 0.0
        %1804 = vmatprep.subr.mxu0 0.0
        %1805 = vmatpush1.msra.mxu0 0.0
        %1806 = vmatprep.subr.mxu0 0.0
        %1807 = vmatpush1.msra.mxu0 0.0
        %1808 = vmatprep.subr.mxu0 0.0
        %1809 = vmatpush1.msra.mxu0 0.0
        %1810 = vmatprep.subr.mxu0 0.0
        %1811 = vmatpush1.msra.mxu0 0.0
        %1812 = vmatprep.mubr.f32.mxu0 0.0
        %1813 = vmatmul.mubr.f32.gmra.mrb[0].mxu0 %v1728
        %v1814 = vpop.f32.mrb[0].mxu0
        %v1815 = vadd.f32 %v1715, %v1814
        %v1816 = vpop.f32.mrb[0].mxu0
        %v1817 = vadd.f32 %v1715, %v1816
        %1818 = vmatprep.mubr.f32.mxu0 0.0
        %1819 = vmatmul.mubr.f32.gmra.mrb[0].mxu0 %v1731
        %v1820 = vpop.f32.mrb[0].mxu0
        %v1821 = vadd.f32 %v1720, %v1820
        %v1822 = vpop.f32.mrb[0].mxu0
        %v1823 = vadd.f32 %v1720, %v1822
        %1824 = vmatprep.mubr.f32.mxu0 0.0
        %1825 = vmatmul.mubr.f32.gmra.mrb[0].mxu0 %v1734
        %v1826 = vpop.f32.mrb[0].mxu0
        %v1827 = vadd.f32 %v1725, %v1826
        %v1828 = vpop.f32.mrb[0].mxu0
        %v1829 = vadd.f32 %v1725, %v1828
        %1830 = vdwg.mxu0
        %1831 = vmatprep.subr.mxu0 %v1695
        %1832 = vmatpush1.msra.mxu0 %v1694
        %1833 = vmatprep.subr.mxu0 %v1699
        %1834 = vmatpush1.msra.mxu0 %v1698
        %1835 = vmatprep.subr.mxu0 %v1746
        %1836 = vmatpush1.msra.mxu0 %v1743
        %1837 = vmatprep.subr.mxu0 0.0
        %1838 = vmatpush1.msra.mxu0 0.0
        %1839 = vmatprep.subr.mxu0 0.0
        %1840 = vmatpush1.msra.mxu0 0.0
        %1841 = vmatprep.subr.mxu0 0.0
        %1842 = vmatpush1.msra.mxu0 0.0
        %1843 = vmatprep.subr.mxu0 0.0
        %1844 = vmatpush1.msra.mxu0 0.0
        %1845 = vmatprep.subr.mxu0 0.0
        %1846 = vmatpush1.msra.mxu0 0.0
        %1847 = vmatprep.subr.mxu0 0.0
        %1848 = vmatpush1.msra.mxu0 0.0
        %1849 = vmatprep.subr.mxu0 0.0
        %1850 = vmatpush1.msra.mxu0 0.0
        %1851 = vmatprep.subr.mxu0 0.0
        %1852 = vmatpush1.msra.mxu0 0.0
        %1853 = vmatprep.subr.mxu0 0.0
        %1854 = vmatpush1.msra.mxu0 0.0
        %1855 = vmatprep.subr.mxu0 0.0
        %1856 = vmatpush1.msra.mxu0 0.0
        %1857 = vmatprep.subr.mxu0 0.0
        %1858 = vmatpush1.msra.mxu0 0.0
        %1859 = vmatprep.subr.mxu0 0.0
        %1860 = vmatpush1.msra.mxu0 0.0
        %1861 = vmatprep.subr.mxu0 0.0
        %1862 = vmatpush1.msra.mxu0 0.0
        %1863 = vmatprep.subr.mxu0 0.0
        %1864 = vmatpush1.msra.mxu0 0.0
        %1865 = vmatprep.subr.mxu0 0.0
        %1866 = vmatpush1.msra.mxu0 0.0
        %1867 = vmatprep.subr.mxu0 0.0
        %1868 = vmatpush1.msra.mxu0 0.0
        %1869 = vmatprep.subr.mxu0 0.0
        %1870 = vmatpush1.msra.mxu0 0.0
        %1871 = vmatprep.subr.mxu0 0.0
        %1872 = vmatpush1.msra.mxu0 0.0
        %1873 = vmatprep.subr.mxu0 0.0
        %1874 = vmatpush1.msra.mxu0 0.0
        %1875 = vmatprep.subr.mxu0 0.0
        %1876 = vmatpush1.msra.mxu0 0.0
        %1877 = vmatprep.subr.mxu0 0.0
        %1878 = vmatpush1.msra.mxu0 0.0
        %1879 = vmatprep.subr.mxu0 0.0
        %1880 = vmatpush1.msra.mxu0 0.0
        %1881 = vmatprep.subr.mxu0 0.0
        %1882 = vmatpush1.msra.mxu0 0.0
        %1883 = vmatprep.subr.mxu0 0.0
        %1884 = vmatpush1.msra.mxu0 0.0
        %1885 = vmatprep.subr.mxu0 0.0
        %1886 = vmatpush1.msra.mxu0 0.0
        %1887 = vmatprep.subr.mxu0 0.0
        %1888 = vmatpush1.msra.mxu0 0.0
        %1889 = vmatprep.subr.mxu0 0.0
        %1890 = vmatpush1.msra.mxu0 0.0
        %1891 = vmatprep.subr.mxu0 0.0
        %1892 = vmatpush1.msra.mxu0 0.0
        %1893 = vmatprep.subr.mxu0 0.0
        %1894 = vmatpush1.msra.mxu0 0.0
        %1895 = vmatprep.mubr.f32.mxu0 0.0
        %1896 = vmatmul.mubr.f32.gmra.mrb[0].mxu0 %v1728
        %v1897 = vpop.f32.mrb[0].mxu0
        %v1898 = vadd.f32 %v1715, %v1897
        %v1899 = vpop.f32.mrb[0].mxu0
        %v1900 = vadd.f32 %v1715, %v1899
        %1901 = vmatprep.mubr.f32.mxu0 0.0
        %1902 = vmatmul.mubr.f32.gmra.mrb[0].mxu0 %v1731
        %v1903 = vpop.f32.mrb[0].mxu0
        %v1904 = vadd.f32 %v1720, %v1903
        %v1905 = vpop.f32.mrb[0].mxu0
        %v1906 = vadd.f32 %v1720, %v1905
        %1907 = vmatprep.mubr.f32.mxu0 0.0
        %1908 = vmatmul.mubr.f32.gmra.mrb[0].mxu0 %v1734
        %v1909 = vpop.f32.mrb[0].mxu0
        %v1910 = vadd.f32 %v1725, %v1909
        %v1911 = vpop.f32.mrb[0].mxu0
        %v1912 = vadd.f32 %v1725, %v1911
        %1913 = vdwg.mxu0
        %v1914 = vtanh.pop %v1815
        %v1915 = vtanh.pop %v1817
        %v1916 = vtanh.pop %v1898
        %v1917 = vtanh.pop %v1900
        %v1918 = vtanh.pop %v1821
        %v1919 = vtanh.pop %v1823
        %v1920 = vtanh.pop %v1904
        %v1921 = vtanh.pop %v1906
        %v1922 = vtanh.pop %v1827
        %v1923 = vtanh.pop %v1829
        %v1924 = vtanh.pop %v1910
        %v1925 = vtanh.pop %v1912
        %s1926 = scalar_lea.vmem %s3, 168
        %v1927 = vld [vmem:[%s1926] sm:$0xff]
        %v1928 = vld [vmem:[%s1926 + $0x8] sm:$0xff]
        %v1929 = vld [vmem:[%s1926 + $0x10] sm:$0xf]
        %s1930 = scalar_lea.vmem %s4, 168
        %v1931 = vld [vmem:[%s1930] sm:$0xff]
        %v1932 = vld [vmem:[%s1930 + $0x8] sm:$0xff]
        %v1933 = vld [vmem:[%s1930 + $0x10] sm:$0xf]
        %1935 = vset.pattern.permute.xlu0 0
        %1936 = vperm.xlu0 %1935, %v1931
        %v1937 = vpop.permute.xlu0 %1936
        %1940 = vset.pattern.permute.xlu0 0
        %1941 = vperm.xlu0 %1940, %v1932
        %v1942 = vpop.permute.xlu0 %1941
        %1945 = vset.pattern.permute.xlu0 0
        %1946 = vperm.xlu0 %1945, %v1933
        %v1947 = vpop.permute.xlu0 %1946
        %v1950 = vsel %vm393, %v1927, 0
        %v1953 = vsel %vm393, %v1928, 0
        %v1956 = vsel %vm393, %v1929, 0
        %v1959 = vsel %vm403, %v1922, 0
        %v1962 = vsel %vm403, %v1923, 0
        %v1965 = vsel %vm403, %v1924, 0
        %v1968 = vsel %vm403, %v1925, 0
        %1970 = vmatprep.subr.mxu0 %v1915
        %1971 = vmatpush1.msra.mxu0 %v1914
        %1972 = vmatprep.subr.mxu0 %v1919
        %1973 = vmatpush1.msra.mxu0 %v1918
        %1974 = vmatprep.subr.mxu0 %v1962
        %1975 = vmatpush1.msra.mxu0 %v1959
        %1976 = vmatprep.subr.mxu0 0.0
        %1977 = vmatpush1.msra.mxu0 0.0
        %1978 = vmatprep.subr.mxu0 0.0
        %1979 = vmatpush1.msra.mxu0 0.0
        %1980 = vmatprep.subr.mxu0 0.0
        %1981 = vmatpush1.msra.mxu0 0.0
        %1982 = vmatprep.subr.mxu0 0.0
        %1983 = vmatpush1.msra.mxu0 0.0
        %1984 = vmatprep.subr.mxu0 0.0
        %1985 = vmatpush1.msra.mxu0 0.0
        %1986 = vmatprep.subr.mxu0 0.0
        %1987 = vmatpush1.msra.mxu0 0.0
        %1988 = vmatprep.subr.mxu0 0.0
        %1989 = vmatpush1.msra.mxu0 0.0
        %1990 = vmatprep.subr.mxu0 0.0
        %1991 = vmatpush1.msra.mxu0 0.0
        %1992 = vmatprep.subr.mxu0 0.0
        %1993 = vmatpush1.msra.mxu0 0.0
        %1994 = vmatprep.subr.mxu0 0.0
        %1995 = vmatpush1.msra.mxu0 0.0
        %1996 = vmatprep.subr.mxu0 0.0
        %1997 = vmatpush1.msra.mxu0 0.0
        %1998 = vmatprep.subr.mxu0 0.0
        %1999 = vmatpush1.msra.mxu0 0.0
        %2000 = vmatprep.subr.mxu0 0.0
        %2001 = vmatpush1.msra.mxu0 0.0
        %2002 = vmatprep.subr.mxu0 0.0
        %2003 = vmatpush1.msra.mxu0 0.0
        %2004 = vmatprep.subr.mxu0 0.0
        %2005 = vmatpush1.msra.mxu0 0.0
        %2006 = vmatprep.subr.mxu0 0.0
        %2007 = vmatpush1.msra.mxu0 0.0
        %2008 = vmatprep.subr.mxu0 0.0
        %2009 = vmatpush1.msra.mxu0 0.0
        %2010 = vmatprep.subr.mxu0 0.0
        %2011 = vmatpush1.msra.mxu0 0.0
        %2012 = vmatprep.subr.mxu0 0.0
        %2013 = vmatpush1.msra.mxu0 0.0
        %2014 = vmatprep.subr.mxu0 0.0
        %2015 = vmatpush1.msra.mxu0 0.0
        %2016 = vmatprep.subr.mxu0 0.0
        %2017 = vmatpush1.msra.mxu0 0.0
        %2018 = vmatprep.subr.mxu0 0.0
        %2019 = vmatpush1.msra.mxu0 0.0
        %2020 = vmatprep.subr.mxu0 0.0
        %2021 = vmatpush1.msra.mxu0 0.0
        %2022 = vmatprep.subr.mxu0 0.0
        %2023 = vmatpush1.msra.mxu0 0.0
        %2024 = vmatprep.subr.mxu0 0.0
        %2025 = vmatpush1.msra.mxu0 0.0
        %2026 = vmatprep.subr.mxu0 0.0
        %2027 = vmatpush1.msra.mxu0 0.0
        %2028 = vmatprep.subr.mxu0 0.0
        %2029 = vmatpush1.msra.mxu0 0.0
        %2030 = vmatprep.subr.mxu0 0.0
        %2031 = vmatpush1.msra.mxu0 0.0
        %2032 = vmatprep.subr.mxu0 0.0
        %2033 = vmatpush1.msra.mxu0 0.0
        %2034 = vmatprep.mubr.f32.mxu0 0.0
        %2035 = vmatmul.mubr.f32.gmra.mrb[0].mxu0 %v1950
        %v2036 = vpop.f32.mrb[0].mxu0
        %v2037 = vadd.f32 %v1937, %v2036
        %v2038 = vpop.f32.mrb[0].mxu0
        %v2039 = vadd.f32 %v1937, %v2038
        %2040 = vmatprep.mubr.f32.mxu0 0.0
        %2041 = vmatmul.mubr.f32.gmra.mrb[0].mxu0 %v1953
        %v2042 = vpop.f32.mrb[0].mxu0
        %v2043 = vadd.f32 %v1942, %v2042
        %v2044 = vpop.f32.mrb[0].mxu0
        %v2045 = vadd.f32 %v1942, %v2044
        %2046 = vmatprep.mubr.f32.mxu0 0.0
        %2047 = vmatmul.mubr.f32.gmra.mrb[0].mxu0 %v1956
        %v2048 = vpop.f32.mrb[0].mxu0
        %v2049 = vadd.f32 %v1947, %v2048
        %v2050 = vpop.f32.mrb[0].mxu0
        %v2051 = vadd.f32 %v1947, %v2050
        %2052 = vdwg.mxu0
        %2053 = vmatprep.subr.mxu0 %v1917
        %2054 = vmatpush1.msra.mxu0 %v1916
        %2055 = vmatprep.subr.mxu0 %v1921
        %2056 = vmatpush1.msra.mxu0 %v1920
        %2057 = vmatprep.subr.mxu0 %v1968
        %2058 = vmatpush1.msra.mxu0 %v1965
        %2059 = vmatprep.subr.mxu0 0.0
        %2060 = vmatpush1.msra.mxu0 0.0
        %2061 = vmatprep.subr.mxu0 0.0
        %2062 = vmatpush1.msra.mxu0 0.0
        %2063 = vmatprep.subr.mxu0 0.0
        %2064 = vmatpush1.msra.mxu0 0.0
        %2065 = vmatprep.subr.mxu0 0.0
        %2066 = vmatpush1.msra.mxu0 0.0
        %2067 = vmatprep.subr.mxu0 0.0
        %2068 = vmatpush1.msra.mxu0 0.0
        %2069 = vmatprep.subr.mxu0 0.0
        %2070 = vmatpush1.msra.mxu0 0.0
        %2071 = vmatprep.subr.mxu0 0.0
        %2072 = vmatpush1.msra.mxu0 0.0
        %2073 = vmatprep.subr.mxu0 0.0
        %2074 = vmatpush1.msra.mxu0 0.0
        %2075 = vmatprep.subr.mxu0 0.0
        %2076 = vmatpush1.msra.mxu0 0.0
        %2077 = vmatprep.subr.mxu0 0.0
        %2078 = vmatpush1.msra.mxu0 0.0
        %2079 = vmatprep.subr.mxu0 0.0
        %2080 = vmatpush1.msra.mxu0 0.0
        %2081 = vmatprep.subr.mxu0 0.0
        %2082 = vmatpush1.msra.mxu0 0.0
        %2083 = vmatprep.subr.mxu0 0.0
        %2084 = vmatpush1.msra.mxu0 0.0
        %2085 = vmatprep.subr.mxu0 0.0
        %2086 = vmatpush1.msra.mxu0 0.0
        %2087 = vmatprep.subr.mxu0 0.0
        %2088 = vmatpush1.msra.mxu0 0.0
        %2089 = vmatprep.subr.mxu0 0.0
        %2090 = vmatpush1.msra.mxu0 0.0
        %2091 = vmatprep.subr.mxu0 0.0
        %2092 = vmatpush1.msra.mxu0 0.0
        %2093 = vmatprep.subr.mxu0 0.0
        %2094 = vmatpush1.msra.mxu0 0.0
        %2095 = vmatprep.subr.mxu0 0.0
        %2096 = vmatpush1.msra.mxu0 0.0
        %2097 = vmatprep.subr.mxu0 0.0
        %2098 = vmatpush1.msra.mxu0 0.0
        %2099 = vmatprep.subr.mxu0 0.0
        %2100 = vmatpush1.msra.mxu0 0.0
        %2101 = vmatprep.subr.mxu0 0.0
        %2102 = vmatpush1.msra.mxu0 0.0
        %2103 = vmatprep.subr.mxu0 0.0
        %2104 = vmatpush1.msra.mxu0 0.0
        %2105 = vmatprep.subr.mxu0 0.0
        %2106 = vmatpush1.msra.mxu0 0.0
        %2107 = vmatprep.subr.mxu0 0.0
        %2108 = vmatpush1.msra.mxu0 0.0
        %2109 = vmatprep.subr.mxu0 0.0
        %2110 = vmatpush1.msra.mxu0 0.0
        %2111 = vmatprep.subr.mxu0 0.0
        %2112 = vmatpush1.msra.mxu0 0.0
        %2113 = vmatprep.subr.mxu0 0.0
        %2114 = vmatpush1.msra.mxu0 0.0
        %2115 = vmatprep.subr.mxu0 0.0
        %2116 = vmatpush1.msra.mxu0 0.0
        %2117 = vmatprep.mubr.f32.mxu0 0.0
        %2118 = vmatmul.mubr.f32.gmra.mrb[0].mxu0 %v1950
        %v2119 = vpop.f32.mrb[0].mxu0
        %v2120 = vadd.f32 %v1937, %v2119
        %v2121 = vpop.f32.mrb[0].mxu0
        %v2122 = vadd.f32 %v1937, %v2121
        %2123 = vmatprep.mubr.f32.mxu0 0.0
        %2124 = vmatmul.mubr.f32.gmra.mrb[0].mxu0 %v1953
        %v2125 = vpop.f32.mrb[0].mxu0
        %v2126 = vadd.f32 %v1942, %v2125
        %v2127 = vpop.f32.mrb[0].mxu0
        %v2128 = vadd.f32 %v1942, %v2127
        %2129 = vmatprep.mubr.f32.mxu0 0.0
        %2130 = vmatmul.mubr.f32.gmra.mrb[0].mxu0 %v1956
        %v2131 = vpop.f32.mrb[0].mxu0
        %v2132 = vadd.f32 %v1947, %v2131
        %v2133 = vpop.f32.mrb[0].mxu0
        %v2134 = vadd.f32 %v1947, %v2133
        %2135 = vdwg.mxu0
        %v2136 = vtanh.pop %v2037
        %v2137 = vtanh.pop %v2039
        %v2138 = vtanh.pop %v2120
        %v2139 = vtanh.pop %v2122
        %v2140 = vtanh.pop %v2043
        %v2141 = vtanh.pop %v2045
        %v2142 = vtanh.pop %v2126
        %v2143 = vtanh.pop %v2128
        %v2144 = vtanh.pop %v2049
        %v2145 = vtanh.pop %v2051
        %v2146 = vtanh.pop %v2132
        %v2147 = vtanh.pop %v2134
        %s2148 = scalar_lea.vmem %s3, 192
        %v2149 = vld [vmem:[%s2148] sm:$0xff]
        %v2150 = vld [vmem:[%s2148 + $0x8] sm:$0xff]
        %v2151 = vld [vmem:[%s2148 + $0x10] sm:$0xf]
        %s2152 = scalar_lea.vmem %s4, 192
        %v2153 = vld [vmem:[%s2152] sm:$0xff]
        %v2154 = vld [vmem:[%s2152 + $0x8] sm:$0xff]
        %v2155 = vld [vmem:[%s2152 + $0x10] sm:$0xf]
        %2157 = vset.pattern.permute.xlu0 0
        %2158 = vperm.xlu0 %2157, %v2153
        %v2159 = vpop.permute.xlu0 %2158
        %2162 = vset.pattern.permute.xlu0 0
        %2163 = vperm.xlu0 %2162, %v2154
        %v2164 = vpop.permute.xlu0 %2163
        %2167 = vset.pattern.permute.xlu0 0
        %2168 = vperm.xlu0 %2167, %v2155
        %v2169 = vpop.permute.xlu0 %2168
        %v2172 = vsel %vm393, %v2149, 0
        %v2175 = vsel %vm393, %v2150, 0
        %v2178 = vsel %vm393, %v2151, 0
        %v2181 = vsel %vm403, %v2144, 0
        %v2184 = vsel %vm403, %v2145, 0
        %v2187 = vsel %vm403, %v2146, 0
        %v2190 = vsel %vm403, %v2147, 0
        %2192 = vmatprep.subr.mxu0 %v2137
        %2193 = vmatpush1.msra.mxu0 %v2136
        %2194 = vmatprep.subr.mxu0 %v2141
        %2195 = vmatpush1.msra.mxu0 %v2140
        %2196 = vmatprep.subr.mxu0 %v2184
        %2197 = vmatpush1.msra.mxu0 %v2181
        %2198 = vmatprep.subr.mxu0 0.0
        %2199 = vmatpush1.msra.mxu0 0.0
        %2200 = vmatprep.subr.mxu0 0.0
        %2201 = vmatpush1.msra.mxu0 0.0
        %2202 = vmatprep.subr.mxu0 0.0
        %2203 = vmatpush1.msra.mxu0 0.0
        %2204 = vmatprep.subr.mxu0 0.0
        %2205 = vmatpush1.msra.mxu0 0.0
        %2206 = vmatprep.subr.mxu0 0.0
        %2207 = vmatpush1.msra.mxu0 0.0
        %2208 = vmatprep.subr.mxu0 0.0
        %2209 = vmatpush1.msra.mxu0 0.0
        %2210 = vmatprep.subr.mxu0 0.0
        %2211 = vmatpush1.msra.mxu0 0.0
        %2212 = vmatprep.subr.mxu0 0.0
        %2213 = vmatpush1.msra.mxu0 0.0
        %2214 = vmatprep.subr.mxu0 0.0
        %2215 = vmatpush1.msra.mxu0 0.0
        %2216 = vmatprep.subr.mxu0 0.0
        %2217 = vmatpush1.msra.mxu0 0.0
        %2218 = vmatprep.subr.mxu0 0.0
        %2219 = vmatpush1.msra.mxu0 0.0
        %2220 = vmatprep.subr.mxu0 0.0
        %2221 = vmatpush1.msra.mxu0 0.0
        %2222 = vmatprep.subr.mxu0 0.0
        %2223 = vmatpush1.msra.mxu0 0.0
        %2224 = vmatprep.subr.mxu0 0.0
        %2225 = vmatpush1.msra.mxu0 0.0
        %2226 = vmatprep.subr.mxu0 0.0
        %2227 = vmatpush1.msra.mxu0 0.0
        %2228 = vmatprep.subr.mxu0 0.0
        %2229 = vmatpush1.msra.mxu0 0.0
        %2230 = vmatprep.subr.mxu0 0.0
        %2231 = vmatpush1.msra.mxu0 0.0
        %2232 = vmatprep.subr.mxu0 0.0
        %2233 = vmatpush1.msra.mxu0 0.0
        %2234 = vmatprep.subr.mxu0 0.0
        %2235 = vmatpush1.msra.mxu0 0.0
        %2236 = vmatprep.subr.mxu0 0.0
        %2237 = vmatpush1.msra.mxu0 0.0
        %2238 = vmatprep.subr.mxu0 0.0
        %2239 = vmatpush1.msra.mxu0 0.0
        %2240 = vmatprep.subr.mxu0 0.0
        %2241 = vmatpush1.msra.mxu0 0.0
        %2242 = vmatprep.subr.mxu0 0.0
        %2243 = vmatpush1.msra.mxu0 0.0
        %2244 = vmatprep.subr.mxu0 0.0
        %2245 = vmatpush1.msra.mxu0 0.0
        %2246 = vmatprep.subr.mxu0 0.0
        %2247 = vmatpush1.msra.mxu0 0.0
        %2248 = vmatprep.subr.mxu0 0.0
        %2249 = vmatpush1.msra.mxu0 0.0
        %2250 = vmatprep.subr.mxu0 0.0
        %2251 = vmatpush1.msra.mxu0 0.0
        %2252 = vmatprep.subr.mxu0 0.0
        %2253 = vmatpush1.msra.mxu0 0.0
        %2254 = vmatprep.subr.mxu0 0.0
        %2255 = vmatpush1.msra.mxu0 0.0
        %2256 = vmatprep.mubr.f32.mxu0 0.0
        %2257 = vmatmul.mubr.f32.gmra.mrb[0].mxu0 %v2172
        %v2258 = vpop.f32.mrb[0].mxu0
        %v2259 = vadd.f32 %v2159, %v2258
        %v2260 = vpop.f32.mrb[0].mxu0
        %v2261 = vadd.f32 %v2159, %v2260
        %2262 = vmatprep.mubr.f32.mxu0 0.0
        %2263 = vmatmul.mubr.f32.gmra.mrb[0].mxu0 %v2175
        %v2264 = vpop.f32.mrb[0].mxu0
        %v2265 = vadd.f32 %v2164, %v2264
        %v2266 = vpop.f32.mrb[0].mxu0
        %v2267 = vadd.f32 %v2164, %v2266
        %2268 = vmatprep.mubr.f32.mxu0 0.0
        %2269 = vmatmul.mubr.f32.gmra.mrb[0].mxu0 %v2178
        %v2270 = vpop.f32.mrb[0].mxu0
        %v2271 = vadd.f32 %v2169, %v2270
        %v2272 = vpop.f32.mrb[0].mxu0
        %v2273 = vadd.f32 %v2169, %v2272
        %2274 = vdwg.mxu0
        %2275 = vmatprep.subr.mxu0 %v2139
        %2276 = vmatpush1.msra.mxu0 %v2138
        %2277 = vmatprep.subr.mxu0 %v2143
        %2278 = vmatpush1.msra.mxu0 %v2142
        %2279 = vmatprep.subr.mxu0 %v2190
        %2280 = vmatpush1.msra.mxu0 %v2187
        %2281 = vmatprep.subr.mxu0 0.0
        %2282 = vmatpush1.msra.mxu0 0.0
        %2283 = vmatprep.subr.mxu0 0.0
        %2284 = vmatpush1.msra.mxu0 0.0
        %2285 = vmatprep.subr.mxu0 0.0
        %2286 = vmatpush1.msra.mxu0 0.0
        %2287 = vmatprep.subr.mxu0 0.0
        %2288 = vmatpush1.msra.mxu0 0.0
        %2289 = vmatprep.subr.mxu0 0.0
        %2290 = vmatpush1.msra.mxu0 0.0
        %2291 = vmatprep.subr.mxu0 0.0
        %2292 = vmatpush1.msra.mxu0 0.0
        %2293 = vmatprep.subr.mxu0 0.0
        %2294 = vmatpush1.msra.mxu0 0.0
        %2295 = vmatprep.subr.mxu0 0.0
        %2296 = vmatpush1.msra.mxu0 0.0
        %2297 = vmatprep.subr.mxu0 0.0
        %2298 = vmatpush1.msra.mxu0 0.0
        %2299 = vmatprep.subr.mxu0 0.0
        %2300 = vmatpush1.msra.mxu0 0.0
        %2301 = vmatprep.subr.mxu0 0.0
        %2302 = vmatpush1.msra.mxu0 0.0
        %2303 = vmatprep.subr.mxu0 0.0
        %2304 = vmatpush1.msra.mxu0 0.0
        %2305 = vmatprep.subr.mxu0 0.0
        %2306 = vmatpush1.msra.mxu0 0.0
        %2307 = vmatprep.subr.mxu0 0.0
        %2308 = vmatpush1.msra.mxu0 0.0
        %2309 = vmatprep.subr.mxu0 0.0
        %2310 = vmatpush1.msra.mxu0 0.0
        %2311 = vmatprep.subr.mxu0 0.0
        %2312 = vmatpush1.msra.mxu0 0.0
        %2313 = vmatprep.subr.mxu0 0.0
        %2314 = vmatpush1.msra.mxu0 0.0
        %2315 = vmatprep.subr.mxu0 0.0
        %2316 = vmatpush1.msra.mxu0 0.0
        %2317 = vmatprep.subr.mxu0 0.0
        %2318 = vmatpush1.msra.mxu0 0.0
        %2319 = vmatprep.subr.mxu0 0.0
        %2320 = vmatpush1.msra.mxu0 0.0
        %2321 = vmatprep.subr.mxu0 0.0
        %2322 = vmatpush1.msra.mxu0 0.0
        %2323 = vmatprep.subr.mxu0 0.0
        %2324 = vmatpush1.msra.mxu0 0.0
        %2325 = vmatprep.subr.mxu0 0.0
        %2326 = vmatpush1.msra.mxu0 0.0
        %2327 = vmatprep.subr.mxu0 0.0
        %2328 = vmatpush1.msra.mxu0 0.0
        %2329 = vmatprep.subr.mxu0 0.0
        %2330 = vmatpush1.msra.mxu0 0.0
        %2331 = vmatprep.subr.mxu0 0.0
        %2332 = vmatpush1.msra.mxu0 0.0
        %2333 = vmatprep.subr.mxu0 0.0
        %2334 = vmatpush1.msra.mxu0 0.0
        %2335 = vmatprep.subr.mxu0 0.0
        %2336 = vmatpush1.msra.mxu0 0.0
        %2337 = vmatprep.subr.mxu0 0.0
        %2338 = vmatpush1.msra.mxu0 0.0
        %2339 = vmatprep.mubr.f32.mxu0 0.0
        %2340 = vmatmul.mubr.f32.gmra.mrb[0].mxu0 %v2172
        %v2341 = vpop.f32.mrb[0].mxu0
        %v2342 = vadd.f32 %v2159, %v2341
        %v2343 = vpop.f32.mrb[0].mxu0
        %v2344 = vadd.f32 %v2159, %v2343
        %2345 = vmatprep.mubr.f32.mxu0 0.0
        %2346 = vmatmul.mubr.f32.gmra.mrb[0].mxu0 %v2175
        %v2347 = vpop.f32.mrb[0].mxu0
        %v2348 = vadd.f32 %v2164, %v2347
        %v2349 = vpop.f32.mrb[0].mxu0
        %v2350 = vadd.f32 %v2164, %v2349
        %2351 = vmatprep.mubr.f32.mxu0 0.0
        %2352 = vmatmul.mubr.f32.gmra.mrb[0].mxu0 %v2178
        %v2353 = vpop.f32.mrb[0].mxu0
        %v2354 = vadd.f32 %v2169, %v2353
        %v2355 = vpop.f32.mrb[0].mxu0
        %v2356 = vadd.f32 %v2169, %v2355
        %2357 = vdwg.mxu0
        %v2358 = vtanh.pop %v2259
        %v2359 = vtanh.pop %v2261
        %v2360 = vtanh.pop %v2342
        %v2361 = vtanh.pop %v2344
        %v2362 = vtanh.pop %v2265
        %v2363 = vtanh.pop %v2267
        %v2364 = vtanh.pop %v2348
        %v2365 = vtanh.pop %v2350
        %v2366 = vtanh.pop %v2271
        %v2367 = vtanh.pop %v2273
        %v2368 = vtanh.pop %v2354
        %v2369 = vtanh.pop %v2356
        %v2370 = vld [vmem:[%s5] sm:$0xff]
        %v2371 = vld [vmem:[%s5 + $0x8] sm:$0xff]
        %v2372 = vld [vmem:[%s5 + $0x10] sm:$0xf]
        %2374 = vset.pattern.permute.xlu0 0
        %2375 = vperm.xlu0 %2374, %v2370
        %v2376 = vpop.permute.xlu0 %2375
        %2379 = vset.pattern.permute.xlu0 0
        %2380 = vperm.xlu0 %2379, %v2371
        %v2381 = vpop.permute.xlu0 %2380
        %2384 = vset.pattern.permute.xlu0 0
        %2385 = vperm.xlu0 %2384, %v2372
        %v2386 = vpop.permute.xlu0 %2385
        %v2388 = vmul.f32 %v2376, %v2358
        %v2389 = vmul.f32 %v2376, %v2359
        %v2390 = vmul.f32 %v2376, %v2360
        %v2391 = vmul.f32 %v2376, %v2361
        %v2392 = vmul.f32 %v2381, %v2362
        %v2393 = vmul.f32 %v2381, %v2363
        %v2394 = vmul.f32 %v2381, %v2364
        %v2395 = vmul.f32 %v2381, %v2365
        %v2396 = vmul.f32 %v2386, %v2366
        %v2397 = vmul.f32 %v2386, %v2367
        %v2398 = vmul.f32 %v2386, %v2368
        %v2399 = vmul.f32 %v2386, %v2369
        %v2400 = vadd.f32 %v2388, %v2392
        %v2401 = vsel %vm403, %v2396, 0.0
        %v2402 = vadd.f32 %v2400, %v2401
        %v2403 = vrot.slane %v2402, 4
        %v2404 = vadd.f32 %v2402, %v2403
        %v2405 = vrot.slane %v2404, 2
        %v2406 = vadd.f32 %v2404, %v2405
        %v2407 = vrot.slane %v2406, 1
        %v2408 = vadd.f32 %v2406, %v2407
        %v2409 = vadd.f32 %v2389, %v2393
        %v2410 = vsel %vm403, %v2397, 0.0
        %v2411 = vadd.f32 %v2409, %v2410
        %v2412 = vrot.slane %v2411, 4
        %v2413 = vadd.f32 %v2411, %v2412
        %v2414 = vrot.slane %v2413, 2
        %v2415 = vadd.f32 %v2413, %v2414
        %v2416 = vrot.slane %v2415, 1
        %v2417 = vadd.f32 %v2415, %v2416
        %v2418 = vadd.f32 %v2390, %v2394
        %v2419 = vsel %vm403, %v2398, 0.0
        %v2420 = vadd.f32 %v2418, %v2419
        %v2421 = vrot.slane %v2420, 4
        %v2422 = vadd.f32 %v2420, %v2421
        %v2423 = vrot.slane %v2422, 2
        %v2424 = vadd.f32 %v2422, %v2423
        %v2425 = vrot.slane %v2424, 1
        %v2426 = vadd.f32 %v2424, %v2425
        %v2427 = vadd.f32 %v2391, %v2395
        %v2428 = vsel %vm403, %v2399, 0.0
        %v2429 = vadd.f32 %v2427, %v2428
        %v2430 = vrot.slane %v2429, 4
        %v2431 = vadd.f32 %v2429, %v2430
        %v2432 = vrot.slane %v2431, 2
        %v2433 = vadd.f32 %v2431, %v2432
        %v2434 = vrot.slane %v2433, 1
        %v2435 = vadd.f32 %v2433, %v2434
        %s2436 = sld [smem:[#allocation2]]
        %v2437 = vstv %s2436
        %v2438 = vadd.f32 %v2408, %v2437
        %v2439 = vadd.f32 %v2417, %v2437
        %v2440 = vadd.f32 %v2426, %v2437
        %v2441 = vadd.f32 %v2435, %v2437
        %v2446 = vcombine.low %v2438, %v2439
        %v2447 = vcombine.low %v2440, %v2441
        %v2449 = vunpack.c.l.s4 1966171168
        %v2450 = vunpack.c.0.s8 %v2449
        %v2451 = vlaneseq
        %v2452 = vshrl.u32 %v2451, 7
        %v2453 = vsub.s32 %v2450, %v2452
        %v2454 = vrot.slane %v2446, %v2453
        %v2456 = vunpack.c.l.s4 1966171168
        %v2457 = vunpack.c.0.s8 %v2456
        %v2458 = vlaneseq
        %v2459 = vshrl.u32 %v2458, 7
        %v2460 = vsub.s32 %v2457, %v2459
        %v2461 = vrot.slane %v2447, %v2460
        %v2462 = vcombine.low %v2454, %v2461
        %v2464 = vunpack.c.l.s4 1966171168
        %v2465 = vunpack.c.0.s8 %v2464
        %v2466 = vlaneseq
        %v2467 = vshrl.u32 %v2466, 7
        %v2468 = vsub.s32 %v2465, %v2467
        %v2469 = vrot.slane %v2462, %v2468
        %v2471 = vlaneseq
        %vm2472 = vcmp.ge.s32.totalorder %v2471, 0
        %vm2473 = vcmp.lt.s32.totalorder %v2471, 512
        %vm2474 = vmand %vm2472, %vm2473
        %2475 = vst.msk [vmem:[%s271] sm:$0xf] %vm2474, %v2469
        %s2476 = sand.u32 %s182, 1
        %s2477 = scalar_lea.sflag [#allocation4], %s2476
        %s2478 = sand.u32 %s182, 1
        %s2479 = smul.addr %s2478, 4
        %s2480 = scalar_lea.vmem [#allocation3], %s2479
        // Predicated region
        $region49: #{tpu_custom_call.1} parent=47 // pred_check
          %p2481 = pneg %p192
        $region50: #{tpu_custom_call.1} parent=47 // pred_check_branch
          %2483 = sbr.rel (%p2481) target = $region52
        $region51: #{tpu_custom_call.1} parent=47 // pred_region
          %s2484 = smul.u32 4, %s22
          %s2486 = ssub.s32 64, 64
          %2487 = vsyncadd %s2477, %s2486
          %s2488 = smul.addr %s2484, 16
          %s2489 = scalar_lea.hbm %s7, %s2488
          %s2491 = sshll.u32 %s2480, 4
          %s2492 = int_to_ptr.vmem [resolvable:$true] %s2491
          %2494 = dma.vmem_to_hbm [thread:$0]  %s2492, 64, %s2489, %s2477
        $region52: #{tpu_custom_call.1} parent=47 // pred_fallthru
          _
      $region48: #{tpu_custom_call.1} parent=5 // pred_fallthru
        _
      %p2495 = scmp.le.s32.totalorder 2, %s17
      // Predicated region
      $region53: #{tpu_custom_call.1} parent=5 // pred_check
        %p2496 = pneg %p2495
      $region54: #{tpu_custom_call.1} parent=5 // pred_check_branch
        %2498 = sbr.rel (%p2496) target = $region56
      $region55: #{tpu_custom_call.1} parent=5 // pred_region
        %s2499 = ssub.s32 %s17, 2
        // Predicated region
        $region57: #{tpu_custom_call.1} parent=55 // pred_check
          %p2500 = pneg %p198
        $region58: #{tpu_custom_call.1} parent=55 // pred_check_branch
          %2502 = sbr.rel (%p2500) target = $region60
        $region59: #{tpu_custom_call.1} parent=55 // pred_region
          %s2503 = sand.u32 %s183, 1
          %s2504 = scalar_lea.sflag [#allocation4], %s2503
          %s2505 = sand.u32 %s183, 1
          %s2506 = smul.addr %s2505, 4
          %s2507 = scalar_lea.vmem [#allocation3], %s2506
          %2508 = dma.done %s2504, 64
        $region60: #{tpu_custom_call.1} parent=55 // pred_fallthru
          _
      $region56: #{tpu_custom_call.1} parent=5 // pred_fallthru
        _
    $region6: #{tpu_custom_call.1} parent=1 // loop_footer
      %s21 = sadd.s32 1, %s17
    $region7: #{tpu_custom_call.1} parent=1 // loop_footer_branch
      %16 = sbr.rel target = $region3
    $region8: #{tpu_custom_call.1} parent=1 // loop_exit
      _
    %2509 = vsyncpa [#allocation4], 1
    %s2510 = scalar_lea.sflag [#allocation4], 1
    %2511 = vsyncpa %s2510, 1

</llo_original>
